<compile_context>
chip_gen: v5e
topology: v5e:2x2
jax: 0.10.0
libtpu: 0.0.40
codegen_flags: <defaults>
</compile_context>

<pallas_src>
import jax
import jax.numpy as jnp
from jax.experimental import pallas as pl
from jax.experimental.pallas import tpu as pltpu

HIDDEN = 16  # CONFIG['hidden_size']


def _lstm_regressor_kernel(x_ref, wih_ref, whh_ref, bias_ref, wfc_ref, bfc_ref,
                           out_ref):
    """Fused input projection + serial LSTM recurrence + linear head.

    x_ref    : (T, D, Bb)   time-major input, batch on lanes
    wih_ref  : (4H, D)      input->gates weights (PyTorch layout)
    whh_ref  : (4H, H)      hidden->gates weights (PyTorch layout)
    bias_ref : (4H, 1)      b_ih + b_hh as a column
    wfc_ref  : (H, 1)       fc weight as a column
    bfc_ref  : (1,)         fc bias (SMEM scalar)
    out_ref  : (1, Bb)      per-batch-column regression output
    """
    T, _, Bb = x_ref.shape
    H = whh_ref.shape[1]

    wih = wih_ref[...]                              # (4H, D), loop-invariant
    whh = whh_ref[...]                              # (4H, H), loop-invariant
    wfc = wfc_ref[...]                              # (H, 1)
    # Hoisted lane-broadcast of the bias (JAX does not CSE broadcast_in_dim;
    # doing this inside the unrolled loop would emit T copies).
    bias_b = jnp.broadcast_to(bias_ref[...], (4 * H, Bb))

    def sig(v):
        # sigmoid(x) == 0.5*(tanh(0.5*x)+1): one EUP push instead of exp+recip.
        return 0.5 * (jnp.tanh(0.5 * v) + 1.0)

    # ---- t = 0 peeled: h = c = 0 -> no recurrent matmul, forget term is dead.
    g0 = jnp.dot(wih, x_ref[0], preferred_element_type=jnp.float32) + bias_b
    c = sig(g0[0:H]) * jnp.tanh(g0[2 * H:3 * H])          # i0 * g0
    h = sig(g0[3 * H:4 * H]) * jnp.tanh(c)                # o0 * tanh(c)

    # ---- t = 1 .. T-1, fully unrolled (T static and small). Only W_hh @ h is
    # on the serial dependency chain; the input projection can issue early.
    for t in range(1, T):
        gx_t = jnp.dot(wih, x_ref[t], preferred_element_type=jnp.float32) + bias_b
        gates = gx_t + jnp.dot(whh, h, preferred_element_type=jnp.float32)
        # Gate-major sublane slices at offsets 0 / H / 2H / 3H (multiples of 8).
        i_f = sig(gates[0:2 * H])                   # i and f in a single EUP push
        g = jnp.tanh(gates[2 * H:3 * H])
        o = sig(gates[3 * H:4 * H])
        c = i_f[H:2 * H] * c + i_f[0:H] * g
        h = o * jnp.tanh(c)

    # Dropout(p=0.1) in eval mode is the identity.
    # fc head: VPU multiply + sublane reduce instead of an N=1 MXU matmul.
    out_ref[...] = jnp.sum(h * wfc, axis=0, keepdims=True) + bfc_ref[0]


def _batch_block(B):
    """Batch block size over the lane axis.

    Capped at 128: keeps the per-step live set (~30 vregs) inside the 64-vreg
    file while filling the 128-lane vreg / MXU N tile.  A block must be a
    multiple of 128 or the full batch (lane-tiling rule); whenever B >= 256
    this automatically yields >= 2 grid blocks, so v7x's two TensorCores both
    get work under dimension_semantics=('parallel',).
    TODO(synk): optionally sweep bb=256 on v6e after confirming no spills.
    """
    if B % 128 == 0:
        return 128
    return B


def regressor_forward(x_btd, params):
    """x_btd: (B, T, D) float32 (PyTorch batch_first layout). Returns (B, 1)."""
    w_ih = params["weight_ih"].astype(jnp.float32)   # (4H, D)
    w_hh = params["weight_hh"].astype(jnp.float32)   # (4H, H)
    bias = (params["bias_ih"] + params["bias_hh"]).astype(jnp.float32)  # (4H,)
    w_fc = params["fc_weight"].astype(jnp.float32)   # (1, H)
    b_fc = params["fc_bias"].astype(jnp.float32)     # (1,)

    B, T, D = x_btd.shape
    H = w_hh.shape[1]
    assert w_ih.shape == (4 * H, D) and w_hh.shape == (4 * H, H)

    # Time-major, feature-on-sublane, batch-on-lane layout for the kernel.
    # Only x makes the HBM round trip; the input projection is fused in-kernel.
    x_tdb = jnp.transpose(x_btd.astype(jnp.float32), (1, 2, 0))     # (T, D, B)
    bias_col = bias.reshape(4 * H, 1)                               # (4H, 1)
    wfc_col = w_fc.reshape(H, 1)                                    # (H, 1)
    bfc = b_fc.reshape(1)                                           # (1,) SMEM

    bb = _batch_block(B)
    grid = (B // bb,)

    y = pl.pallas_call(
        _lstm_regressor_kernel,
        out_shape=jax.ShapeDtypeStruct((1, B), jnp.float32),
        grid=grid,
        in_specs=[
            pl.BlockSpec((T, D, bb), lambda i: (0, 0, i)),
            pl.BlockSpec((4 * H, D), lambda i: (0, 0)),
            pl.BlockSpec((4 * H, H), lambda i: (0, 0)),
            pl.BlockSpec((4 * H, 1), lambda i: (0, 0)),
            pl.BlockSpec((H, 1), lambda i: (0, 0)),
            pl.BlockSpec(memory_space=pltpu.MemorySpace.SMEM),
        ],
        out_specs=pl.BlockSpec((1, bb), lambda i: (0, i)),
        compiler_params=pltpu.CompilerParams(
            dimension_semantics=("parallel",)),
    )(x_tdb, w_ih, w_hh, bias_col, wfc_col, bfc)

    return y.reshape(B, 1)


def init_params(key, in_sz, hidden=HIDDEN):
    """Deterministic init matching Regressor.__init__ shapes:
    xavier_uniform for weights, zeros for biases."""
    def xavier(k, shape):
        fan_out, fan_in = shape
        limit = (6.0 / (fan_in + fan_out)) ** 0.5
        return jax.random.uniform(k, shape, jnp.float32, -limit, limit)

    k1, k2, k3 = jax.random.split(key, 3)
    return {
        "weight_ih": xavier(k1, (4 * hidden, in_sz)),
        "weight_hh": xavier(k2, (4 * hidden, hidden)),
        "bias_ih": jnp.zeros((4 * hidden,), jnp.float32),
        "bias_hh": jnp.zeros((4 * hidden,), jnp.float32),
        "fc_weight": xavier(k3, (1, hidden)),
        "fc_bias": jnp.zeros((1,), jnp.float32),
    }


def _reference_forward(x_btd, params):
    """Pure-JAX reference of the same forward pass (for correctness check)."""
    H = params["weight_hh"].shape[1]
    wih_t = params["weight_ih"].T
    whh_t = params["weight_hh"].T
    b = params["bias_ih"] + params["bias_hh"]

    def step(carry, x_t):
        h, c = carry
        g = x_t @ wih_t + h @ whh_t + b
        i = jax.nn.sigmoid(g[:, 0 * H:1 * H])
        f = jax.nn.sigmoid(g[:, 1 * H:2 * H])
        gg = jnp.tanh(g[:, 2 * H:3 * H])
        o = jax.nn.sigmoid(g[:, 3 * H:4 * H])
        c = f * c + i * gg
        h = o * jnp.tanh(c)
        return (h, c), None

    B = x_btd.shape[0]
    h0 = jnp.zeros((B, H), jnp.float32)
    (h, _), _ = jax.lax.scan(step, (h0, h0), jnp.transpose(x_btd, (1, 0, 2)))
    return h @ params["fc_weight"].T + params["fc_bias"]


if __name__ == "__main__":
    B, T, D = 8, 12, 8   # batch, window_size (CONFIG), in_sz
    key = jax.random.PRNGKey(0)
    kx, kp = jax.random.split(key)

    x = jax.random.normal(kx, (B, T, D), jnp.float32)   # PyTorch batch_first
    params = init_params(kp, in_sz=D)

    y = regressor_forward(x, params)
    y = jax.block_until_ready(y)

    y_ref = jax.block_until_ready(_reference_forward(x, params))
    assert y.shape == (B, 1)
    assert jnp.allclose(y, y_ref, atol=1e-4, rtol=1e-4), "mismatch vs JAX reference"

    print("KERNEL_OK")
</pallas_src>

<mosaic_0001>
module attributes {stable_mosaic.version = 11 : i64} {
  func.func @_lstm_regressor_kernel(%arg0: i32, %arg1: memref<12x8x8xf32, #tpu.memory_space<vmem>>, %arg2: memref<64x8xf32, #tpu.memory_space<vmem>>, %arg3: memref<64x16xf32, #tpu.memory_space<vmem>>, %arg4: memref<64x1xf32, #tpu.memory_space<vmem>>, %arg5: memref<16x1xf32, #tpu.memory_space<vmem>>, %arg6: memref<1xf32, #tpu.memory_space<smem>>, %arg7: memref<1x8xf32, #tpu.memory_space<vmem>>) attributes {dimension_semantics = [#tpu.dimension_semantics<parallel>], iteration_bounds = array<i64: 1>, scalar_prefetch = 0 : i64, scratch_operands = 0 : i64, tpu.core_type = #tpu.core_type<tc>, window_params = [{transform_indices = @transform_0, window_bounds = array<i64: 12, 8, 8>}, {pipeline_mode = #tpu.pipeline_mode<synchronous>, transform_indices = @transform_1, window_bounds = array<i64: 64, 8>}, {pipeline_mode = #tpu.pipeline_mode<synchronous>, transform_indices = @transform_2, window_bounds = array<i64: 64, 16>}, {pipeline_mode = #tpu.pipeline_mode<synchronous>, transform_indices = @transform_3, window_bounds = array<i64: 64, 1>}, {pipeline_mode = #tpu.pipeline_mode<synchronous>, transform_indices = @transform_4, window_bounds = array<i64: 16, 1>}, {transform_indices = @transform_5, window_bounds = array<i64: 1>}, {transform_indices = @transform_6, window_bounds = array<i64: 1, 8>}]} {
    %c0 = arith.constant 0 : index
    %c0_0 = arith.constant 0 : index
    %0 = vector.load %arg2[%c0, %c0_0] : memref<64x8xf32, #tpu.memory_space<vmem>>, vector<64x8xf32>
    %c0_1 = arith.constant 0 : index
    %c0_2 = arith.constant 0 : index
    %1 = vector.load %arg3[%c0_1, %c0_2] : memref<64x16xf32, #tpu.memory_space<vmem>>, vector<64x16xf32>
    %c0_3 = arith.constant 0 : index
    %c0_4 = arith.constant 0 : index
    %2 = vector.load %arg5[%c0_3, %c0_4] : memref<16x1xf32, #tpu.memory_space<vmem>>, vector<16x1xf32>
    %c0_5 = arith.constant 0 : index
    %c0_6 = arith.constant 0 : index
    %3 = vector.load %arg4[%c0_5, %c0_6] : memref<64x1xf32, #tpu.memory_space<vmem>>, vector<64x1xf32>
    %4 = vector.shape_cast %3 : vector<64x1xf32> to vector<64x1xf32>
    %5 = vector.broadcast %4 : vector<64x1xf32> to vector<64x8xf32>
    %c0_7 = arith.constant 0 : index
    %c0_8 = arith.constant 0 : index
    %c0_9 = arith.constant 0 : index
    %6 = vector.load %arg1[%c0_7, %c0_8, %c0_9] : memref<12x8x8xf32, #tpu.memory_space<vmem>>, vector<1x8x8xf32>
    %7 = vector.shape_cast %6 : vector<1x8x8xf32> to vector<8x8xf32>
    %cst = arith.constant dense<0.000000e+00> : vector<64x8xf32>
    %8 = tpu.matmul %0, %7, %cst {dimension_numbers = #tpu.dot_dimension_numbers<[1], [0], [0], [1], [0, 0, 1, 1], [], []>} : vector<64x8xf32>, vector<8x8xf32>, vector<64x8xf32> -> vector<64x8xf32>
    %9 = arith.addf %8, %5 : vector<64x8xf32>
    %10 = vector.extract_strided_slice %9 {offsets = [0, 0], sizes = [16, 8], strides = [1, 1]} : vector<64x8xf32> to vector<16x8xf32>
    %cst_10 = arith.constant 5.000000e-01 : f32
    %11 = vector.broadcast %cst_10 : f32 to vector<16x8xf32>
    %12 = arith.mulf %11, %10 : vector<16x8xf32>
    %13 = math.tanh %12 : vector<16x8xf32>
    %cst_11 = arith.constant 1.000000e+00 : f32
    %14 = vector.broadcast %cst_11 : f32 to vector<16x8xf32>
    %15 = arith.addf %13, %14 : vector<16x8xf32>
    %cst_12 = arith.constant 5.000000e-01 : f32
    %16 = vector.broadcast %cst_12 : f32 to vector<16x8xf32>
    %17 = arith.mulf %16, %15 : vector<16x8xf32>
    %18 = vector.extract_strided_slice %9 {offsets = [32, 0], sizes = [16, 8], strides = [1, 1]} : vector<64x8xf32> to vector<16x8xf32>
    %19 = math.tanh %18 : vector<16x8xf32>
    %20 = arith.mulf %17, %19 : vector<16x8xf32>
    %21 = vector.extract_strided_slice %9 {offsets = [48, 0], sizes = [16, 8], strides = [1, 1]} : vector<64x8xf32> to vector<16x8xf32>
    %cst_13 = arith.constant 5.000000e-01 : f32
    %22 = vector.broadcast %cst_13 : f32 to vector<16x8xf32>
    %23 = arith.mulf %22, %21 : vector<16x8xf32>
    %24 = math.tanh %23 : vector<16x8xf32>
    %cst_14 = arith.constant 1.000000e+00 : f32
    %25 = vector.broadcast %cst_14 : f32 to vector<16x8xf32>
    %26 = arith.addf %24, %25 : vector<16x8xf32>
    %cst_15 = arith.constant 5.000000e-01 : f32
    %27 = vector.broadcast %cst_15 : f32 to vector<16x8xf32>
    %28 = arith.mulf %27, %26 : vector<16x8xf32>
    %29 = math.tanh %20 : vector<16x8xf32>
    %30 = arith.mulf %28, %29 : vector<16x8xf32>
    %c1 = arith.constant 1 : index
    %c0_16 = arith.constant 0 : index
    %c0_17 = arith.constant 0 : index
    %31 = vector.load %arg1[%c1, %c0_16, %c0_17] : memref<12x8x8xf32, #tpu.memory_space<vmem>>, vector<1x8x8xf32>
    %32 = vector.shape_cast %31 : vector<1x8x8xf32> to vector<8x8xf32>
    %cst_18 = arith.constant dense<0.000000e+00> : vector<64x8xf32>
    %33 = tpu.matmul %0, %32, %cst_18 {dimension_numbers = #tpu.dot_dimension_numbers<[1], [0], [0], [1], [0, 0, 1, 1], [], []>} : vector<64x8xf32>, vector<8x8xf32>, vector<64x8xf32> -> vector<64x8xf32>
    %34 = arith.addf %33, %5 : vector<64x8xf32>
    %cst_19 = arith.constant dense<0.000000e+00> : vector<64x8xf32>
    %35 = tpu.matmul %1, %30, %cst_19 {dimension_numbers = #tpu.dot_dimension_numbers<[1], [0], [0], [1], [0, 0, 1, 1], [], []>} : vector<64x16xf32>, vector<16x8xf32>, vector<64x8xf32> -> vector<64x8xf32>
    %36 = arith.addf %34, %35 : vector<64x8xf32>
    %37 = vector.extract_strided_slice %36 {offsets = [0, 0], sizes = [32, 8], strides = [1, 1]} : vector<64x8xf32> to vector<32x8xf32>
    %cst_20 = arith.constant 5.000000e-01 : f32
    %38 = vector.broadcast %cst_20 : f32 to vector<32x8xf32>
    %39 = arith.mulf %38, %37 : vector<32x8xf32>
    %40 = math.tanh %39 : vector<32x8xf32>
    %cst_21 = arith.constant 1.000000e+00 : f32
    %41 = vector.broadcast %cst_21 : f32 to vector<32x8xf32>
    %42 = arith.addf %40, %41 : vector<32x8xf32>
    %cst_22 = arith.constant 5.000000e-01 : f32
    %43 = vector.broadcast %cst_22 : f32 to vector<32x8xf32>
    %44 = arith.mulf %43, %42 : vector<32x8xf32>
    %45 = vector.extract_strided_slice %36 {offsets = [32, 0], sizes = [16, 8], strides = [1, 1]} : vector<64x8xf32> to vector<16x8xf32>
    %46 = math.tanh %45 : vector<16x8xf32>
    %47 = vector.extract_strided_slice %36 {offsets = [48, 0], sizes = [16, 8], strides = [1, 1]} : vector<64x8xf32> to vector<16x8xf32>
    %cst_23 = arith.constant 5.000000e-01 : f32
    %48 = vector.broadcast %cst_23 : f32 to vector<16x8xf32>
    %49 = arith.mulf %48, %47 : vector<16x8xf32>
    %50 = math.tanh %49 : vector<16x8xf32>
    %cst_24 = arith.constant 1.000000e+00 : f32
    %51 = vector.broadcast %cst_24 : f32 to vector<16x8xf32>
    %52 = arith.addf %50, %51 : vector<16x8xf32>
    %cst_25 = arith.constant 5.000000e-01 : f32
    %53 = vector.broadcast %cst_25 : f32 to vector<16x8xf32>
    %54 = arith.mulf %53, %52 : vector<16x8xf32>
    %55 = vector.extract_strided_slice %44 {offsets = [16, 0], sizes = [16, 8], strides = [1, 1]} : vector<32x8xf32> to vector<16x8xf32>
    %56 = arith.mulf %55, %20 : vector<16x8xf32>
    %57 = vector.extract_strided_slice %44 {offsets = [0, 0], sizes = [16, 8], strides = [1, 1]} : vector<32x8xf32> to vector<16x8xf32>
    %58 = arith.mulf %57, %46 : vector<16x8xf32>
    %59 = arith.addf %56, %58 : vector<16x8xf32>
    %60 = math.tanh %59 : vector<16x8xf32>
    %61 = arith.mulf %54, %60 : vector<16x8xf32>
    %c2 = arith.constant 2 : index
    %c0_26 = arith.constant 0 : index
    %c0_27 = arith.constant 0 : index
    %62 = vector.load %arg1[%c2, %c0_26, %c0_27] : memref<12x8x8xf32, #tpu.memory_space<vmem>>, vector<1x8x8xf32>
    %63 = vector.shape_cast %62 : vector<1x8x8xf32> to vector<8x8xf32>
    %cst_28 = arith.constant dense<0.000000e+00> : vector<64x8xf32>
    %64 = tpu.matmul %0, %63, %cst_28 {dimension_numbers = #tpu.dot_dimension_numbers<[1], [0], [0], [1], [0, 0, 1, 1], [], []>} : vector<64x8xf32>, vector<8x8xf32>, vector<64x8xf32> -> vector<64x8xf32>
    %65 = arith.addf %64, %5 : vector<64x8xf32>
    %cst_29 = arith.constant dense<0.000000e+00> : vector<64x8xf32>
    %66 = tpu.matmul %1, %61, %cst_29 {dimension_numbers = #tpu.dot_dimension_numbers<[1], [0], [0], [1], [0, 0, 1, 1], [], []>} : vector<64x16xf32>, vector<16x8xf32>, vector<64x8xf32> -> vector<64x8xf32>
    %67 = arith.addf %65, %66 : vector<64x8xf32>
    %68 = vector.extract_strided_slice %67 {offsets = [0, 0], sizes = [32, 8], strides = [1, 1]} : vector<64x8xf32> to vector<32x8xf32>
    %cst_30 = arith.constant 5.000000e-01 : f32
    %69 = vector.broadcast %cst_30 : f32 to vector<32x8xf32>
    %70 = arith.mulf %69, %68 : vector<32x8xf32>
    %71 = math.tanh %70 : vector<32x8xf32>
    %cst_31 = arith.constant 1.000000e+00 : f32
    %72 = vector.broadcast %cst_31 : f32 to vector<32x8xf32>
    %73 = arith.addf %71, %72 : vector<32x8xf32>
    %cst_32 = arith.constant 5.000000e-01 : f32
    %74 = vector.broadcast %cst_32 : f32 to vector<32x8xf32>
    %75 = arith.mulf %74, %73 : vector<32x8xf32>
    %76 = vector.extract_strided_slice %67 {offsets = [32, 0], sizes = [16, 8], strides = [1, 1]} : vector<64x8xf32> to vector<16x8xf32>
    %77 = math.tanh %76 : vector<16x8xf32>
    %78 = vector.extract_strided_slice %67 {offsets = [48, 0], sizes = [16, 8], strides = [1, 1]} : vector<64x8xf32> to vector<16x8xf32>
    %cst_33 = arith.constant 5.000000e-01 : f32
    %79 = vector.broadcast %cst_33 : f32 to vector<16x8xf32>
    %80 = arith.mulf %79, %78 : vector<16x8xf32>
    %81 = math.tanh %80 : vector<16x8xf32>
    %cst_34 = arith.constant 1.000000e+00 : f32
    %82 = vector.broadcast %cst_34 : f32 to vector<16x8xf32>
    %83 = arith.addf %81, %82 : vector<16x8xf32>
    %cst_35 = arith.constant 5.000000e-01 : f32
    %84 = vector.broadcast %cst_35 : f32 to vector<16x8xf32>
    %85 = arith.mulf %84, %83 : vector<16x8xf32>
    %86 = vector.extract_strided_slice %75 {offsets = [16, 0], sizes = [16, 8], strides = [1, 1]} : vector<32x8xf32> to vector<16x8xf32>
    %87 = arith.mulf %86, %59 : vector<16x8xf32>
    %88 = vector.extract_strided_slice %75 {offsets = [0, 0], sizes = [16, 8], strides = [1, 1]} : vector<32x8xf32> to vector<16x8xf32>
    %89 = arith.mulf %88, %77 : vector<16x8xf32>
    %90 = arith.addf %87, %89 : vector<16x8xf32>
    %91 = math.tanh %90 : vector<16x8xf32>
    %92 = arith.mulf %85, %91 : vector<16x8xf32>
    %c3 = arith.constant 3 : index
    %c0_36 = arith.constant 0 : index
    %c0_37 = arith.constant 0 : index
    %93 = vector.load %arg1[%c3, %c0_36, %c0_37] : memref<12x8x8xf32, #tpu.memory_space<vmem>>, vector<1x8x8xf32>
    %94 = vector.shape_cast %93 : vector<1x8x8xf32> to vector<8x8xf32>
    %cst_38 = arith.constant dense<0.000000e+00> : vector<64x8xf32>
    %95 = tpu.matmul %0, %94, %cst_38 {dimension_numbers = #tpu.dot_dimension_numbers<[1], [0], [0], [1], [0, 0, 1, 1], [], []>} : vector<64x8xf32>, vector<8x8xf32>, vector<64x8xf32> -> vector<64x8xf32>
    %96 = arith.addf %95, %5 : vector<64x8xf32>
    %cst_39 = arith.constant dense<0.000000e+00> : vector<64x8xf32>
    %97 = tpu.matmul %1, %92, %cst_39 {dimension_numbers = #tpu.dot_dimension_numbers<[1], [0], [0], [1], [0, 0, 1, 1], [], []>} : vector<64x16xf32>, vector<16x8xf32>, vector<64x8xf32> -> vector<64x8xf32>
    %98 = arith.addf %96, %97 : vector<64x8xf32>
    %99 = vector.extract_strided_slice %98 {offsets = [0, 0], sizes = [32, 8], strides = [1, 1]} : vector<64x8xf32> to vector<32x8xf32>
    %cst_40 = arith.constant 5.000000e-01 : f32
    %100 = vector.broadcast %cst_40 : f32 to vector<32x8xf32>
    %101 = arith.mulf %100, %99 : vector<32x8xf32>
    %102 = math.tanh %101 : vector<32x8xf32>
    %cst_41 = arith.constant 1.000000e+00 : f32
    %103 = vector.broadcast %cst_41 : f32 to vector<32x8xf32>
    %104 = arith.addf %102, %103 : vector<32x8xf32>
    %cst_42 = arith.constant 5.000000e-01 : f32
    %105 = vector.broadcast %cst_42 : f32 to vector<32x8xf32>
    %106 = arith.mulf %105, %104 : vector<32x8xf32>
    %107 = vector.extract_strided_slice %98 {offsets = [32, 0], sizes = [16, 8], strides = [1, 1]} : vector<64x8xf32> to vector<16x8xf32>
    %108 = math.tanh %107 : vector<16x8xf32>
    %109 = vector.extract_strided_slice %98 {offsets = [48, 0], sizes = [16, 8], strides = [1, 1]} : vector<64x8xf32> to vector<16x8xf32>
    %cst_43 = arith.constant 5.000000e-01 : f32
    %110 = vector.broadcast %cst_43 : f32 to vector<16x8xf32>
    %111 = arith.mulf %110, %109 : vector<16x8xf32>
    %112 = math.tanh %111 : vector<16x8xf32>
    %cst_44 = arith.constant 1.000000e+00 : f32
    %113 = vector.broadcast %cst_44 : f32 to vector<16x8xf32>
    %114 = arith.addf %112, %113 : vector<16x8xf32>
    %cst_45 = arith.constant 5.000000e-01 : f32
    %115 = vector.broadcast %cst_45 : f32 to vector<16x8xf32>
    %116 = arith.mulf %115, %114 : vector<16x8xf32>
    %117 = vector.extract_strided_slice %106 {offsets = [16, 0], sizes = [16, 8], strides = [1, 1]} : vector<32x8xf32> to vector<16x8xf32>
    %118 = arith.mulf %117, %90 : vector<16x8xf32>
    %119 = vector.extract_strided_slice %106 {offsets = [0, 0], sizes = [16, 8], strides = [1, 1]} : vector<32x8xf32> to vector<16x8xf32>
    %120 = arith.mulf %119, %108 : vector<16x8xf32>
    %121 = arith.addf %118, %120 : vector<16x8xf32>
    %122 = math.tanh %121 : vector<16x8xf32>
    %123 = arith.mulf %116, %122 : vector<16x8xf32>
    %c4 = arith.constant 4 : index
    %c0_46 = arith.constant 0 : index
    %c0_47 = arith.constant 0 : index
    %124 = vector.load %arg1[%c4, %c0_46, %c0_47] : memref<12x8x8xf32, #tpu.memory_space<vmem>>, vector<1x8x8xf32>
    %125 = vector.shape_cast %124 : vector<1x8x8xf32> to vector<8x8xf32>
    %cst_48 = arith.constant dense<0.000000e+00> : vector<64x8xf32>
    %126 = tpu.matmul %0, %125, %cst_48 {dimension_numbers = #tpu.dot_dimension_numbers<[1], [0], [0], [1], [0, 0, 1, 1], [], []>} : vector<64x8xf32>, vector<8x8xf32>, vector<64x8xf32> -> vector<64x8xf32>
    %127 = arith.addf %126, %5 : vector<64x8xf32>
    %cst_49 = arith.constant dense<0.000000e+00> : vector<64x8xf32>
    %128 = tpu.matmul %1, %123, %cst_49 {dimension_numbers = #tpu.dot_dimension_numbers<[1], [0], [0], [1], [0, 0, 1, 1], [], []>} : vector<64x16xf32>, vector<16x8xf32>, vector<64x8xf32> -> vector<64x8xf32>
    %129 = arith.addf %127, %128 : vector<64x8xf32>
    %130 = vector.extract_strided_slice %129 {offsets = [0, 0], sizes = [32, 8], strides = [1, 1]} : vector<64x8xf32> to vector<32x8xf32>
    %cst_50 = arith.constant 5.000000e-01 : f32
    %131 = vector.broadcast %cst_50 : f32 to vector<32x8xf32>
    %132 = arith.mulf %131, %130 : vector<32x8xf32>
    %133 = math.tanh %132 : vector<32x8xf32>
    %cst_51 = arith.constant 1.000000e+00 : f32
    %134 = vector.broadcast %cst_51 : f32 to vector<32x8xf32>
    %135 = arith.addf %133, %134 : vector<32x8xf32>
    %cst_52 = arith.constant 5.000000e-01 : f32
    %136 = vector.broadcast %cst_52 : f32 to vector<32x8xf32>
    %137 = arith.mulf %136, %135 : vector<32x8xf32>
    %138 = vector.extract_strided_slice %129 {offsets = [32, 0], sizes = [16, 8], strides = [1, 1]} : vector<64x8xf32> to vector<16x8xf32>
    %139 = math.tanh %138 : vector<16x8xf32>
    %140 = vector.extract_strided_slice %129 {offsets = [48, 0], sizes = [16, 8], strides = [1, 1]} : vector<64x8xf32> to vector<16x8xf32>
    %cst_53 = arith.constant 5.000000e-01 : f32
    %141 = vector.broadcast %cst_53 : f32 to vector<16x8xf32>
    %142 = arith.mulf %141, %140 : vector<16x8xf32>
    %143 = math.tanh %142 : vector<16x8xf32>
    %cst_54 = arith.constant 1.000000e+00 : f32
    %144 = vector.broadcast %cst_54 : f32 to vector<16x8xf32>
    %145 = arith.addf %143, %144 : vector<16x8xf32>
    %cst_55 = arith.constant 5.000000e-01 : f32
    %146 = vector.broadcast %cst_55 : f32 to vector<16x8xf32>
    %147 = arith.mulf %146, %145 : vector<16x8xf32>
    %148 = vector.extract_strided_slice %137 {offsets = [16, 0], sizes = [16, 8], strides = [1, 1]} : vector<32x8xf32> to vector<16x8xf32>
    %149 = arith.mulf %148, %121 : vector<16x8xf32>
    %150 = vector.extract_strided_slice %137 {offsets = [0, 0], sizes = [16, 8], strides = [1, 1]} : vector<32x8xf32> to vector<16x8xf32>
    %151 = arith.mulf %150, %139 : vector<16x8xf32>
    %152 = arith.addf %149, %151 : vector<16x8xf32>
    %153 = math.tanh %152 : vector<16x8xf32>
    %154 = arith.mulf %147, %153 : vector<16x8xf32>
    %c5 = arith.constant 5 : index
    %c0_56 = arith.constant 0 : index
    %c0_57 = arith.constant 0 : index
    %155 = vector.load %arg1[%c5, %c0_56, %c0_57] : memref<12x8x8xf32, #tpu.memory_space<vmem>>, vector<1x8x8xf32>
    %156 = vector.shape_cast %155 : vector<1x8x8xf32> to vector<8x8xf32>
    %cst_58 = arith.constant dense<0.000000e+00> : vector<64x8xf32>
    %157 = tpu.matmul %0, %156, %cst_58 {dimension_numbers = #tpu.dot_dimension_numbers<[1], [0], [0], [1], [0, 0, 1, 1], [], []>} : vector<64x8xf32>, vector<8x8xf32>, vector<64x8xf32> -> vector<64x8xf32>
    %158 = arith.addf %157, %5 : vector<64x8xf32>
    %cst_59 = arith.constant dense<0.000000e+00> : vector<64x8xf32>
    %159 = tpu.matmul %1, %154, %cst_59 {dimension_numbers = #tpu.dot_dimension_numbers<[1], [0], [0], [1], [0, 0, 1, 1], [], []>} : vector<64x16xf32>, vector<16x8xf32>, vector<64x8xf32> -> vector<64x8xf32>
    %160 = arith.addf %158, %159 : vector<64x8xf32>
    %161 = vector.extract_strided_slice %160 {offsets = [0, 0], sizes = [32, 8], strides = [1, 1]} : vector<64x8xf32> to vector<32x8xf32>
    %cst_60 = arith.constant 5.000000e-01 : f32
    %162 = vector.broadcast %cst_60 : f32 to vector<32x8xf32>
    %163 = arith.mulf %162, %161 : vector<32x8xf32>
    %164 = math.tanh %163 : vector<32x8xf32>
    %cst_61 = arith.constant 1.000000e+00 : f32
    %165 = vector.broadcast %cst_61 : f32 to vector<32x8xf32>
    %166 = arith.addf %164, %165 : vector<32x8xf32>
    %cst_62 = arith.constant 5.000000e-01 : f32
    %167 = vector.broadcast %cst_62 : f32 to vector<32x8xf32>
    %168 = arith.mulf %167, %166 : vector<32x8xf32>
    %169 = vector.extract_strided_slice %160 {offsets = [32, 0], sizes = [16, 8], strides = [1, 1]} : vector<64x8xf32> to vector<16x8xf32>
    %170 = math.tanh %169 : vector<16x8xf32>
    %171 = vector.extract_strided_slice %160 {offsets = [48, 0], sizes = [16, 8], strides = [1, 1]} : vector<64x8xf32> to vector<16x8xf32>
    %cst_63 = arith.constant 5.000000e-01 : f32
    %172 = vector.broadcast %cst_63 : f32 to vector<16x8xf32>
    %173 = arith.mulf %172, %171 : vector<16x8xf32>
    %174 = math.tanh %173 : vector<16x8xf32>
    %cst_64 = arith.constant 1.000000e+00 : f32
    %175 = vector.broadcast %cst_64 : f32 to vector<16x8xf32>
    %176 = arith.addf %174, %175 : vector<16x8xf32>
    %cst_65 = arith.constant 5.000000e-01 : f32
    %177 = vector.broadcast %cst_65 : f32 to vector<16x8xf32>
    %178 = arith.mulf %177, %176 : vector<16x8xf32>
    %179 = vector.extract_strided_slice %168 {offsets = [16, 0], sizes = [16, 8], strides = [1, 1]} : vector<32x8xf32> to vector<16x8xf32>
    %180 = arith.mulf %179, %152 : vector<16x8xf32>
    %181 = vector.extract_strided_slice %168 {offsets = [0, 0], sizes = [16, 8], strides = [1, 1]} : vector<32x8xf32> to vector<16x8xf32>
    %182 = arith.mulf %181, %170 : vector<16x8xf32>
    %183 = arith.addf %180, %182 : vector<16x8xf32>
    %184 = math.tanh %183 : vector<16x8xf32>
    %185 = arith.mulf %178, %184 : vector<16x8xf32>
    %c6 = arith.constant 6 : index
    %c0_66 = arith.constant 0 : index
    %c0_67 = arith.constant 0 : index
    %186 = vector.load %arg1[%c6, %c0_66, %c0_67] : memref<12x8x8xf32, #tpu.memory_space<vmem>>, vector<1x8x8xf32>
    %187 = vector.shape_cast %186 : vector<1x8x8xf32> to vector<8x8xf32>
    %cst_68 = arith.constant dense<0.000000e+00> : vector<64x8xf32>
    %188 = tpu.matmul %0, %187, %cst_68 {dimension_numbers = #tpu.dot_dimension_numbers<[1], [0], [0], [1], [0, 0, 1, 1], [], []>} : vector<64x8xf32>, vector<8x8xf32>, vector<64x8xf32> -> vector<64x8xf32>
    %189 = arith.addf %188, %5 : vector<64x8xf32>
    %cst_69 = arith.constant dense<0.000000e+00> : vector<64x8xf32>
    %190 = tpu.matmul %1, %185, %cst_69 {dimension_numbers = #tpu.dot_dimension_numbers<[1], [0], [0], [1], [0, 0, 1, 1], [], []>} : vector<64x16xf32>, vector<16x8xf32>, vector<64x8xf32> -> vector<64x8xf32>
    %191 = arith.addf %189, %190 : vector<64x8xf32>
    %192 = vector.extract_strided_slice %191 {offsets = [0, 0], sizes = [32, 8], strides = [1, 1]} : vector<64x8xf32> to vector<32x8xf32>
    %cst_70 = arith.constant 5.000000e-01 : f32
    %193 = vector.broadcast %cst_70 : f32 to vector<32x8xf32>
    %194 = arith.mulf %193, %192 : vector<32x8xf32>
    %195 = math.tanh %194 : vector<32x8xf32>
    %cst_71 = arith.constant 1.000000e+00 : f32
    %196 = vector.broadcast %cst_71 : f32 to vector<32x8xf32>
    %197 = arith.addf %195, %196 : vector<32x8xf32>
    %cst_72 = arith.constant 5.000000e-01 : f32
    %198 = vector.broadcast %cst_72 : f32 to vector<32x8xf32>
    %199 = arith.mulf %198, %197 : vector<32x8xf32>
    %200 = vector.extract_strided_slice %191 {offsets = [32, 0], sizes = [16, 8], strides = [1, 1]} : vector<64x8xf32> to vector<16x8xf32>
    %201 = math.tanh %200 : vector<16x8xf32>
    %202 = vector.extract_strided_slice %191 {offsets = [48, 0], sizes = [16, 8], strides = [1, 1]} : vector<64x8xf32> to vector<16x8xf32>
    %cst_73 = arith.constant 5.000000e-01 : f32
    %203 = vector.broadcast %cst_73 : f32 to vector<16x8xf32>
    %204 = arith.mulf %203, %202 : vector<16x8xf32>
    %205 = math.tanh %204 : vector<16x8xf32>
    %cst_74 = arith.constant 1.000000e+00 : f32
    %206 = vector.broadcast %cst_74 : f32 to vector<16x8xf32>
    %207 = arith.addf %205, %206 : vector<16x8xf32>
    %cst_75 = arith.constant 5.000000e-01 : f32
    %208 = vector.broadcast %cst_75 : f32 to vector<16x8xf32>
    %209 = arith.mulf %208, %207 : vector<16x8xf32>
    %210 = vector.extract_strided_slice %199 {offsets = [16, 0], sizes = [16, 8], strides = [1, 1]} : vector<32x8xf32> to vector<16x8xf32>
    %211 = arith.mulf %210, %183 : vector<16x8xf32>
    %212 = vector.extract_strided_slice %199 {offsets = [0, 0], sizes = [16, 8], strides = [1, 1]} : vector<32x8xf32> to vector<16x8xf32>
    %213 = arith.mulf %212, %201 : vector<16x8xf32>
    %214 = arith.addf %211, %213 : vector<16x8xf32>
    %215 = math.tanh %214 : vector<16x8xf32>
    %216 = arith.mulf %209, %215 : vector<16x8xf32>
    %c7 = arith.constant 7 : index
    %c0_76 = arith.constant 0 : index
    %c0_77 = arith.constant 0 : index
    %217 = vector.load %arg1[%c7, %c0_76, %c0_77] : memref<12x8x8xf32, #tpu.memory_space<vmem>>, vector<1x8x8xf32>
    %218 = vector.shape_cast %217 : vector<1x8x8xf32> to vector<8x8xf32>
    %cst_78 = arith.constant dense<0.000000e+00> : vector<64x8xf32>
    %219 = tpu.matmul %0, %218, %cst_78 {dimension_numbers = #tpu.dot_dimension_numbers<[1], [0], [0], [1], [0, 0, 1, 1], [], []>} : vector<64x8xf32>, vector<8x8xf32>, vector<64x8xf32> -> vector<64x8xf32>
    %220 = arith.addf %219, %5 : vector<64x8xf32>
    %cst_79 = arith.constant dense<0.000000e+00> : vector<64x8xf32>
    %221 = tpu.matmul %1, %216, %cst_79 {dimension_numbers = #tpu.dot_dimension_numbers<[1], [0], [0], [1], [0, 0, 1, 1], [], []>} : vector<64x16xf32>, vector<16x8xf32>, vector<64x8xf32> -> vector<64x8xf32>
    %222 = arith.addf %220, %221 : vector<64x8xf32>
    %223 = vector.extract_strided_slice %222 {offsets = [0, 0], sizes = [32, 8], strides = [1, 1]} : vector<64x8xf32> to vector<32x8xf32>
    %cst_80 = arith.constant 5.000000e-01 : f32
    %224 = vector.broadcast %cst_80 : f32 to vector<32x8xf32>
    %225 = arith.mulf %224, %223 : vector<32x8xf32>
    %226 = math.tanh %225 : vector<32x8xf32>
    %cst_81 = arith.constant 1.000000e+00 : f32
    %227 = vector.broadcast %cst_81 : f32 to vector<32x8xf32>
    %228 = arith.addf %226, %227 : vector<32x8xf32>
    %cst_82 = arith.constant 5.000000e-01 : f32
    %229 = vector.broadcast %cst_82 : f32 to vector<32x8xf32>
    %230 = arith.mulf %229, %228 : vector<32x8xf32>
    %231 = vector.extract_strided_slice %222 {offsets = [32, 0], sizes = [16, 8], strides = [1, 1]} : vector<64x8xf32> to vector<16x8xf32>
    %232 = math.tanh %231 : vector<16x8xf32>
    %233 = vector.extract_strided_slice %222 {offsets = [48, 0], sizes = [16, 8], strides = [1, 1]} : vector<64x8xf32> to vector<16x8xf32>
    %cst_83 = arith.constant 5.000000e-01 : f32
    %234 = vector.broadcast %cst_83 : f32 to vector<16x8xf32>
    %235 = arith.mulf %234, %233 : vector<16x8xf32>
    %236 = math.tanh %235 : vector<16x8xf32>
    %cst_84 = arith.constant 1.000000e+00 : f32
    %237 = vector.broadcast %cst_84 : f32 to vector<16x8xf32>
    %238 = arith.addf %236, %237 : vector<16x8xf32>
    %cst_85 = arith.constant 5.000000e-01 : f32
    %239 = vector.broadcast %cst_85 : f32 to vector<16x8xf32>
    %240 = arith.mulf %239, %238 : vector<16x8xf32>
    %241 = vector.extract_strided_slice %230 {offsets = [16, 0], sizes = [16, 8], strides = [1, 1]} : vector<32x8xf32> to vector<16x8xf32>
    %242 = arith.mulf %241, %214 : vector<16x8xf32>
    %243 = vector.extract_strided_slice %230 {offsets = [0, 0], sizes = [16, 8], strides = [1, 1]} : vector<32x8xf32> to vector<16x8xf32>
    %244 = arith.mulf %243, %232 : vector<16x8xf32>
    %245 = arith.addf %242, %244 : vector<16x8xf32>
    %246 = math.tanh %245 : vector<16x8xf32>
    %247 = arith.mulf %240, %246 : vector<16x8xf32>
    %c8 = arith.constant 8 : index
    %c0_86 = arith.constant 0 : index
    %c0_87 = arith.constant 0 : index
    %248 = vector.load %arg1[%c8, %c0_86, %c0_87] : memref<12x8x8xf32, #tpu.memory_space<vmem>>, vector<1x8x8xf32>
    %249 = vector.shape_cast %248 : vector<1x8x8xf32> to vector<8x8xf32>
    %cst_88 = arith.constant dense<0.000000e+00> : vector<64x8xf32>
    %250 = tpu.matmul %0, %249, %cst_88 {dimension_numbers = #tpu.dot_dimension_numbers<[1], [0], [0], [1], [0, 0, 1, 1], [], []>} : vector<64x8xf32>, vector<8x8xf32>, vector<64x8xf32> -> vector<64x8xf32>
    %251 = arith.addf %250, %5 : vector<64x8xf32>
    %cst_89 = arith.constant dense<0.000000e+00> : vector<64x8xf32>
    %252 = tpu.matmul %1, %247, %cst_89 {dimension_numbers = #tpu.dot_dimension_numbers<[1], [0], [0], [1], [0, 0, 1, 1], [], []>} : vector<64x16xf32>, vector<16x8xf32>, vector<64x8xf32> -> vector<64x8xf32>
    %253 = arith.addf %251, %252 : vector<64x8xf32>
    %254 = vector.extract_strided_slice %253 {offsets = [0, 0], sizes = [32, 8], strides = [1, 1]} : vector<64x8xf32> to vector<32x8xf32>
    %cst_90 = arith.constant 5.000000e-01 : f32
    %255 = vector.broadcast %cst_90 : f32 to vector<32x8xf32>
    %256 = arith.mulf %255, %254 : vector<32x8xf32>
    %257 = math.tanh %256 : vector<32x8xf32>
    %cst_91 = arith.constant 1.000000e+00 : f32
    %258 = vector.broadcast %cst_91 : f32 to vector<32x8xf32>
    %259 = arith.addf %257, %258 : vector<32x8xf32>
    %cst_92 = arith.constant 5.000000e-01 : f32
    %260 = vector.broadcast %cst_92 : f32 to vector<32x8xf32>
    %261 = arith.mulf %260, %259 : vector<32x8xf32>
    %262 = vector.extract_strided_slice %253 {offsets = [32, 0], sizes = [16, 8], strides = [1, 1]} : vector<64x8xf32> to vector<16x8xf32>
    %263 = math.tanh %262 : vector<16x8xf32>
    %264 = vector.extract_strided_slice %253 {offsets = [48, 0], sizes = [16, 8], strides = [1, 1]} : vector<64x8xf32> to vector<16x8xf32>
    %cst_93 = arith.constant 5.000000e-01 : f32
    %265 = vector.broadcast %cst_93 : f32 to vector<16x8xf32>
    %266 = arith.mulf %265, %264 : vector<16x8xf32>
    %267 = math.tanh %266 : vector<16x8xf32>
    %cst_94 = arith.constant 1.000000e+00 : f32
    %268 = vector.broadcast %cst_94 : f32 to vector<16x8xf32>
    %269 = arith.addf %267, %268 : vector<16x8xf32>
    %cst_95 = arith.constant 5.000000e-01 : f32
    %270 = vector.broadcast %cst_95 : f32 to vector<16x8xf32>
    %271 = arith.mulf %270, %269 : vector<16x8xf32>
    %272 = vector.extract_strided_slice %261 {offsets = [16, 0], sizes = [16, 8], strides = [1, 1]} : vector<32x8xf32> to vector<16x8xf32>
    %273 = arith.mulf %272, %245 : vector<16x8xf32>
    %274 = vector.extract_strided_slice %261 {offsets = [0, 0], sizes = [16, 8], strides = [1, 1]} : vector<32x8xf32> to vector<16x8xf32>
    %275 = arith.mulf %274, %263 : vector<16x8xf32>
    %276 = arith.addf %273, %275 : vector<16x8xf32>
    %277 = math.tanh %276 : vector<16x8xf32>
    %278 = arith.mulf %271, %277 : vector<16x8xf32>
    %c9 = arith.constant 9 : index
    %c0_96 = arith.constant 0 : index
    %c0_97 = arith.constant 0 : index
    %279 = vector.load %arg1[%c9, %c0_96, %c0_97] : memref<12x8x8xf32, #tpu.memory_space<vmem>>, vector<1x8x8xf32>
    %280 = vector.shape_cast %279 : vector<1x8x8xf32> to vector<8x8xf32>
    %cst_98 = arith.constant dense<0.000000e+00> : vector<64x8xf32>
    %281 = tpu.matmul %0, %280, %cst_98 {dimension_numbers = #tpu.dot_dimension_numbers<[1], [0], [0], [1], [0, 0, 1, 1], [], []>} : vector<64x8xf32>, vector<8x8xf32>, vector<64x8xf32> -> vector<64x8xf32>
    %282 = arith.addf %281, %5 : vector<64x8xf32>
    %cst_99 = arith.constant dense<0.000000e+00> : vector<64x8xf32>
    %283 = tpu.matmul %1, %278, %cst_99 {dimension_numbers = #tpu.dot_dimension_numbers<[1], [0], [0], [1], [0, 0, 1, 1], [], []>} : vector<64x16xf32>, vector<16x8xf32>, vector<64x8xf32> -> vector<64x8xf32>
    %284 = arith.addf %282, %283 : vector<64x8xf32>
    %285 = vector.extract_strided_slice %284 {offsets = [0, 0], sizes = [32, 8], strides = [1, 1]} : vector<64x8xf32> to vector<32x8xf32>
    %cst_100 = arith.constant 5.000000e-01 : f32
    %286 = vector.broadcast %cst_100 : f32 to vector<32x8xf32>
    %287 = arith.mulf %286, %285 : vector<32x8xf32>
    %288 = math.tanh %287 : vector<32x8xf32>
    %cst_101 = arith.constant 1.000000e+00 : f32
    %289 = vector.broadcast %cst_101 : f32 to vector<32x8xf32>
    %290 = arith.addf %288, %289 : vector<32x8xf32>
    %cst_102 = arith.constant 5.000000e-01 : f32
    %291 = vector.broadcast %cst_102 : f32 to vector<32x8xf32>
    %292 = arith.mulf %291, %290 : vector<32x8xf32>
    %293 = vector.extract_strided_slice %284 {offsets = [32, 0], sizes = [16, 8], strides = [1, 1]} : vector<64x8xf32> to vector<16x8xf32>
    %294 = math.tanh %293 : vector<16x8xf32>
    %295 = vector.extract_strided_slice %284 {offsets = [48, 0], sizes = [16, 8], strides = [1, 1]} : vector<64x8xf32> to vector<16x8xf32>
    %cst_103 = arith.constant 5.000000e-01 : f32
    %296 = vector.broadcast %cst_103 : f32 to vector<16x8xf32>
    %297 = arith.mulf %296, %295 : vector<16x8xf32>
    %298 = math.tanh %297 : vector<16x8xf32>
    %cst_104 = arith.constant 1.000000e+00 : f32
    %299 = vector.broadcast %cst_104 : f32 to vector<16x8xf32>
    %300 = arith.addf %298, %299 : vector<16x8xf32>
    %cst_105 = arith.constant 5.000000e-01 : f32
    %301 = vector.broadcast %cst_105 : f32 to vector<16x8xf32>
    %302 = arith.mulf %301, %300 : vector<16x8xf32>
    %303 = vector.extract_strided_slice %292 {offsets = [16, 0], sizes = [16, 8], strides = [1, 1]} : vector<32x8xf32> to vector<16x8xf32>
    %304 = arith.mulf %303, %276 : vector<16x8xf32>
    %305 = vector.extract_strided_slice %292 {offsets = [0, 0], sizes = [16, 8], strides = [1, 1]} : vector<32x8xf32> to vector<16x8xf32>
    %306 = arith.mulf %305, %294 : vector<16x8xf32>
    %307 = arith.addf %304, %306 : vector<16x8xf32>
    %308 = math.tanh %307 : vector<16x8xf32>
    %309 = arith.mulf %302, %308 : vector<16x8xf32>
    %c10 = arith.constant 10 : index
    %c0_106 = arith.constant 0 : index
    %c0_107 = arith.constant 0 : index
    %310 = vector.load %arg1[%c10, %c0_106, %c0_107] : memref<12x8x8xf32, #tpu.memory_space<vmem>>, vector<1x8x8xf32>
    %311 = vector.shape_cast %310 : vector<1x8x8xf32> to vector<8x8xf32>
    %cst_108 = arith.constant dense<0.000000e+00> : vector<64x8xf32>
    %312 = tpu.matmul %0, %311, %cst_108 {dimension_numbers = #tpu.dot_dimension_numbers<[1], [0], [0], [1], [0, 0, 1, 1], [], []>} : vector<64x8xf32>, vector<8x8xf32>, vector<64x8xf32> -> vector<64x8xf32>
    %313 = arith.addf %312, %5 : vector<64x8xf32>
    %cst_109 = arith.constant dense<0.000000e+00> : vector<64x8xf32>
    %314 = tpu.matmul %1, %309, %cst_109 {dimension_numbers = #tpu.dot_dimension_numbers<[1], [0], [0], [1], [0, 0, 1, 1], [], []>} : vector<64x16xf32>, vector<16x8xf32>, vector<64x8xf32> -> vector<64x8xf32>
    %315 = arith.addf %313, %314 : vector<64x8xf32>
    %316 = vector.extract_strided_slice %315 {offsets = [0, 0], sizes = [32, 8], strides = [1, 1]} : vector<64x8xf32> to vector<32x8xf32>
    %cst_110 = arith.constant 5.000000e-01 : f32
    %317 = vector.broadcast %cst_110 : f32 to vector<32x8xf32>
    %318 = arith.mulf %317, %316 : vector<32x8xf32>
    %319 = math.tanh %318 : vector<32x8xf32>
    %cst_111 = arith.constant 1.000000e+00 : f32
    %320 = vector.broadcast %cst_111 : f32 to vector<32x8xf32>
    %321 = arith.addf %319, %320 : vector<32x8xf32>
    %cst_112 = arith.constant 5.000000e-01 : f32
    %322 = vector.broadcast %cst_112 : f32 to vector<32x8xf32>
    %323 = arith.mulf %322, %321 : vector<32x8xf32>
    %324 = vector.extract_strided_slice %315 {offsets = [32, 0], sizes = [16, 8], strides = [1, 1]} : vector<64x8xf32> to vector<16x8xf32>
    %325 = math.tanh %324 : vector<16x8xf32>
    %326 = vector.extract_strided_slice %315 {offsets = [48, 0], sizes = [16, 8], strides = [1, 1]} : vector<64x8xf32> to vector<16x8xf32>
    %cst_113 = arith.constant 5.000000e-01 : f32
    %327 = vector.broadcast %cst_113 : f32 to vector<16x8xf32>
    %328 = arith.mulf %327, %326 : vector<16x8xf32>
    %329 = math.tanh %328 : vector<16x8xf32>
    %cst_114 = arith.constant 1.000000e+00 : f32
    %330 = vector.broadcast %cst_114 : f32 to vector<16x8xf32>
    %331 = arith.addf %329, %330 : vector<16x8xf32>
    %cst_115 = arith.constant 5.000000e-01 : f32
    %332 = vector.broadcast %cst_115 : f32 to vector<16x8xf32>
    %333 = arith.mulf %332, %331 : vector<16x8xf32>
    %334 = vector.extract_strided_slice %323 {offsets = [16, 0], sizes = [16, 8], strides = [1, 1]} : vector<32x8xf32> to vector<16x8xf32>
    %335 = arith.mulf %334, %307 : vector<16x8xf32>
    %336 = vector.extract_strided_slice %323 {offsets = [0, 0], sizes = [16, 8], strides = [1, 1]} : vector<32x8xf32> to vector<16x8xf32>
    %337 = arith.mulf %336, %325 : vector<16x8xf32>
    %338 = arith.addf %335, %337 : vector<16x8xf32>
    %339 = math.tanh %338 : vector<16x8xf32>
    %340 = arith.mulf %333, %339 : vector<16x8xf32>
    %c11 = arith.constant 11 : index
    %c0_116 = arith.constant 0 : index
    %c0_117 = arith.constant 0 : index
    %341 = vector.load %arg1[%c11, %c0_116, %c0_117] : memref<12x8x8xf32, #tpu.memory_space<vmem>>, vector<1x8x8xf32>
    %342 = vector.shape_cast %341 : vector<1x8x8xf32> to vector<8x8xf32>
    %cst_118 = arith.constant dense<0.000000e+00> : vector<64x8xf32>
    %343 = tpu.matmul %0, %342, %cst_118 {dimension_numbers = #tpu.dot_dimension_numbers<[1], [0], [0], [1], [0, 0, 1, 1], [], []>} : vector<64x8xf32>, vector<8x8xf32>, vector<64x8xf32> -> vector<64x8xf32>
    %344 = arith.addf %343, %5 : vector<64x8xf32>
    %cst_119 = arith.constant dense<0.000000e+00> : vector<64x8xf32>
    %345 = tpu.matmul %1, %340, %cst_119 {dimension_numbers = #tpu.dot_dimension_numbers<[1], [0], [0], [1], [0, 0, 1, 1], [], []>} : vector<64x16xf32>, vector<16x8xf32>, vector<64x8xf32> -> vector<64x8xf32>
    %346 = arith.addf %344, %345 : vector<64x8xf32>
    %347 = vector.extract_strided_slice %346 {offsets = [0, 0], sizes = [32, 8], strides = [1, 1]} : vector<64x8xf32> to vector<32x8xf32>
    %cst_120 = arith.constant 5.000000e-01 : f32
    %348 = vector.broadcast %cst_120 : f32 to vector<32x8xf32>
    %349 = arith.mulf %348, %347 : vector<32x8xf32>
    %350 = math.tanh %349 : vector<32x8xf32>
    %cst_121 = arith.constant 1.000000e+00 : f32
    %351 = vector.broadcast %cst_121 : f32 to vector<32x8xf32>
    %352 = arith.addf %350, %351 : vector<32x8xf32>
    %cst_122 = arith.constant 5.000000e-01 : f32
    %353 = vector.broadcast %cst_122 : f32 to vector<32x8xf32>
    %354 = arith.mulf %353, %352 : vector<32x8xf32>
    %355 = vector.extract_strided_slice %346 {offsets = [32, 0], sizes = [16, 8], strides = [1, 1]} : vector<64x8xf32> to vector<16x8xf32>
    %356 = math.tanh %355 : vector<16x8xf32>
    %357 = vector.extract_strided_slice %346 {offsets = [48, 0], sizes = [16, 8], strides = [1, 1]} : vector<64x8xf32> to vector<16x8xf32>
    %cst_123 = arith.constant 5.000000e-01 : f32
    %358 = vector.broadcast %cst_123 : f32 to vector<16x8xf32>
    %359 = arith.mulf %358, %357 : vector<16x8xf32>
    %360 = math.tanh %359 : vector<16x8xf32>
    %cst_124 = arith.constant 1.000000e+00 : f32
    %361 = vector.broadcast %cst_124 : f32 to vector<16x8xf32>
    %362 = arith.addf %360, %361 : vector<16x8xf32>
    %cst_125 = arith.constant 5.000000e-01 : f32
    %363 = vector.broadcast %cst_125 : f32 to vector<16x8xf32>
    %364 = arith.mulf %363, %362 : vector<16x8xf32>
    %365 = vector.extract_strided_slice %354 {offsets = [16, 0], sizes = [16, 8], strides = [1, 1]} : vector<32x8xf32> to vector<16x8xf32>
    %366 = arith.mulf %365, %338 : vector<16x8xf32>
    %367 = vector.extract_strided_slice %354 {offsets = [0, 0], sizes = [16, 8], strides = [1, 1]} : vector<32x8xf32> to vector<16x8xf32>
    %368 = arith.mulf %367, %356 : vector<16x8xf32>
    %369 = arith.addf %366, %368 : vector<16x8xf32>
    %370 = math.tanh %369 : vector<16x8xf32>
    %371 = arith.mulf %364, %370 : vector<16x8xf32>
    %372 = vector.broadcast %2 : vector<16x1xf32> to vector<16x8xf32>
    %373 = arith.mulf %371, %372 : vector<16x8xf32>
    %cst_126 = arith.constant dense<0.000000e+00> : vector<8xf32>
    %374 = vector.multi_reduction <add>, %373, %cst_126 [0] : vector<16x8xf32> to vector<8xf32>
    %375 = vector.shape_cast %374 : vector<8xf32> to vector<1x8xf32>
    %c0_127 = arith.constant 0 : index
    %376 = memref.load %arg6[%c0_127] : memref<1xf32, #tpu.memory_space<smem>>
    %377 = vector.broadcast %376 : f32 to vector<1x8xf32>
    %378 = arith.addf %375, %377 : vector<1x8xf32>
    %c0_128 = arith.constant 0 : index
    %c0_129 = arith.constant 0 : index
    %379 = vector.load %arg7[%c0_128, %c0_129] : memref<1x8xf32, #tpu.memory_space<vmem>>, vector<1x8xf32>
    tpu.vector_store %arg7[%c0_128, %c0_129], %378 {strides = array<i32>} : memref<1x8xf32, #tpu.memory_space<vmem>>, vector<1x8xf32>,
    return
  }
  func.func @transform_0(%arg0: i32) -> (i32, i32, i32) {
    %c0_i32 = arith.constant 0 : i32
    %c0_i32_0 = arith.constant 0 : i32
    %c0_i32_1 = arith.constant 0 : i32
    return %c0_i32, %c0_i32_0, %arg0 : i32, i32, i32
  }
  func.func @transform_1(%arg0: i32) -> (i32, i32) {
    %c0_i32 = arith.constant 0 : i32
    %c0_i32_0 = arith.constant 0 : i32
    %c0_i32_1 = arith.constant 0 : i32
    return %c0_i32, %c0_i32_0 : i32, i32
  }
  func.func @transform_2(%arg0: i32) -> (i32, i32) {
    %c0_i32 = arith.constant 0 : i32
    %c0_i32_0 = arith.constant 0 : i32
    %c0_i32_1 = arith.constant 0 : i32
    return %c0_i32, %c0_i32_0 : i32, i32
  }
  func.func @transform_3(%arg0: i32) -> (i32, i32) {
    %c0_i32 = arith.constant 0 : i32
    %c0_i32_0 = arith.constant 0 : i32
    %c0_i32_1 = arith.constant 0 : i32
    return %c0_i32, %c0_i32_0 : i32, i32
  }
  func.func @transform_4(%arg0: i32) -> (i32, i32) {
    %c0_i32 = arith.constant 0 : i32
    %c0_i32_0 = arith.constant 0 : i32
    %c0_i32_1 = arith.constant 0 : i32
    return %c0_i32, %c0_i32_0 : i32, i32
  }
  func.func @transform_5(%arg0: i32) -> i32 {
    %c0_i32 = arith.constant 0 : i32
    %c0_i32_0 = arith.constant 0 : i32
    return %c0_i32 : i32
  }
  func.func @transform_6(%arg0: i32) -> (i32, i32) {
    %c0_i32 = arith.constant 0 : i32
    %c0_i32_0 = arith.constant 0 : i32
    return %c0_i32, %arg0 : i32, i32
  }
}

</mosaic_0001>

<llo_original>
// kernel: tpu_custom_call.1
$region0: #{tpu_custom_call.1}
  #allocation0 [shape = 'u32[]', space=smem, size = 0x4, offset = 0x4, fixed_abs, tag = 'smem constant byte address 0x4 - core index']
  #allocation1 [shape = 'u32[72,128]{1,0:T(1,128)}', space=vmem, size = 0x9000, scoped, tag = 'internal scratch']
  #allocation2 [shape = 'f32[1]{0:T(128)S(6)}', space=smem, size = 0x200, scoped, tag = 'scoped memory for tpu_custom_call.1']
  %s0 = inlined_call_operand.vmem [shape: f32[12,8,8], index: 0, kind: input, shape index: {}]
  %s1 = inlined_call_operand.vmem [shape: f32[64,8], index: 1, kind: input, shape index: {}]
  %s2 = inlined_call_operand.vmem [shape: f32[64,16], index: 2, kind: input, shape index: {}]
  %s3 = inlined_call_operand.vmem [shape: f32[64,1], index: 3, kind: input, shape index: {}]
  %s4 = inlined_call_operand.vmem [shape: f32[16,1], index: 4, kind: input, shape index: {}]
  %s5 = inlined_call_operand.<no memory space> [shape: f32[1], index: 5, kind: input, shape index: {}]
  %s6 = inlined_call_operand.hbm [shape: f32[1,8], index: 6, kind: output, shape index: {}]
  %s7 = sld [smem:[#allocation0]]
  $region34: #{tpu_custom_call.1} parent=0
    _
  %s9 = ssub.s32 1, %s7
  %s10 = scalar_select 0, %s9, %s7
  %11 = sst [smem:[#allocation2]] %s5
  $region1: #{tpu_custom_call.1} parent=0
    #allocation3 [shape = 'u8[512]{0}', space=vmem, size = 0x400, scoped, tag = 'output window, operand 0, single buffered']
    #allocation4 [shape = 's32[1]{0}', space=sflag, size = 0x4, scoped, tag = 'scoped memory for tpu_custom_call.1']
    %12 = vsyncpa [#allocation4], 0
    // Predicated region
    $region2: #{tpu_custom_call.1} parent=1 // pred_check
      _
    $region3: #{tpu_custom_call.1} parent=1 // pred_check_branch
      %14 = sbr.rel (0) target = $region5
    $region4: #{tpu_custom_call.1} parent=1 // pred_region
      _
    $region5: #{tpu_custom_call.1} parent=1 // pred_fallthru
      _
    // Predicated region
    $region6: #{tpu_custom_call.1} parent=1 // pred_check
      _
    $region7: #{tpu_custom_call.1} parent=1 // pred_check_branch
      %16 = sbr.rel (0) target = $region9
    $region8: #{tpu_custom_call.1} parent=1 // pred_region
      _
    $region9: #{tpu_custom_call.1} parent=1 // pred_fallthru
      _
    // Predicated region
    $region10: #{tpu_custom_call.1} parent=1 // pred_check
      _
    $region11: #{tpu_custom_call.1} parent=1 // pred_check_branch
      %18 = sbr.rel (0) target = $region13
    $region12: #{tpu_custom_call.1} parent=1 // pred_region
      _
    $region13: #{tpu_custom_call.1} parent=1 // pred_fallthru
      _
    // Predicated region
    $region14: #{tpu_custom_call.1} parent=1 // pred_check
      _
    $region15: #{tpu_custom_call.1} parent=1 // pred_check_branch
      %20 = sbr.rel (0) target = $region17
    $region16: #{tpu_custom_call.1} parent=1 // pred_region
      _
    $region17: #{tpu_custom_call.1} parent=1 // pred_fallthru
      _
    // Predicated region
    $region18: #{tpu_custom_call.1} parent=1 // pred_check
      _
    $region19: #{tpu_custom_call.1} parent=1 // pred_check_branch
      %22 = sbr.rel (0) target = $region21
    $region20: #{tpu_custom_call.1} parent=1 // pred_region
      _
    $region21: #{tpu_custom_call.1} parent=1 // pred_fallthru
      _
    // Predicated region
    $region22: #{tpu_custom_call.1} parent=1 // pred_check
      _
    $region23: #{tpu_custom_call.1} parent=1 // pred_check_branch
      %24 = sbr.rel (0) target = $region25
    $region24: #{tpu_custom_call.1} parent=1 // pred_region
      _
    $region25: #{tpu_custom_call.1} parent=1 // pred_fallthru
      _
    %v25 = vld [vmem:[%s1] sm:$0xff]
    %v26 = vld [vmem:[%s1 + $0x8] sm:$0xff]
    %v27 = vld [vmem:[%s1 + $0x10] sm:$0xff]
    %v28 = vld [vmem:[%s1 + $0x18] sm:$0xff]
    %v29 = vld [vmem:[%s1 + $0x20] sm:$0xff]
    %v30 = vld [vmem:[%s1 + $0x28] sm:$0xff]
    %v31 = vld [vmem:[%s1 + $0x30] sm:$0xff]
    %v32 = vld [vmem:[%s1 + $0x38] sm:$0xff]
    %v33 = vld [vmem:[%s2] sm:$0xff]
    %v34 = vld [vmem:[%s2 + $0x8] sm:$0xff]
    %v35 = vld [vmem:[%s2 + $0x10] sm:$0xff]
    %v36 = vld [vmem:[%s2 + $0x18] sm:$0xff]
    %v37 = vld [vmem:[%s2 + $0x20] sm:$0xff]
    %v38 = vld [vmem:[%s2 + $0x28] sm:$0xff]
    %v39 = vld [vmem:[%s2 + $0x30] sm:$0xff]
    %v40 = vld [vmem:[%s2 + $0x38] sm:$0xff]
    %v41 = vld [vmem:[%s4] sm:$0xff]
    %v42 = vld [vmem:[%s4 + $0x8] sm:$0xff]
    %v43 = vld [vmem:[%s3] sm:$0xff]
    %v44 = vld [vmem:[%s3 + $0x8] sm:$0xff]
    %v45 = vld [vmem:[%s3 + $0x10] sm:$0xff]
    %v46 = vld [vmem:[%s3 + $0x18] sm:$0xff]
    %v47 = vld [vmem:[%s3 + $0x20] sm:$0xff]
    %v48 = vld [vmem:[%s3 + $0x28] sm:$0xff]
    %v49 = vld [vmem:[%s3 + $0x30] sm:$0xff]
    %v50 = vld [vmem:[%s3 + $0x38] sm:$0xff]
    %52 = vset.pattern.permute.xlu0 0
    %53 = vperm.xlu0 %52, %v43
    %v54 = vpop.permute.xlu0 %53
    %57 = vset.pattern.permute.xlu0 0
    %58 = vperm.xlu0 %57, %v44
    %v59 = vpop.permute.xlu0 %58
    %62 = vset.pattern.permute.xlu0 0
    %63 = vperm.xlu0 %62, %v45
    %v64 = vpop.permute.xlu0 %63
    %67 = vset.pattern.permute.xlu0 0
    %68 = vperm.xlu0 %67, %v46
    %v69 = vpop.permute.xlu0 %68
    %72 = vset.pattern.permute.xlu0 0
    %73 = vperm.xlu0 %72, %v47
    %v74 = vpop.permute.xlu0 %73
    %77 = vset.pattern.permute.xlu0 0
    %78 = vperm.xlu0 %77, %v48
    %v79 = vpop.permute.xlu0 %78
    %82 = vset.pattern.permute.xlu0 0
    %83 = vperm.xlu0 %82, %v49
    %v84 = vpop.permute.xlu0 %83
    %87 = vset.pattern.permute.xlu0 0
    %88 = vperm.xlu0 %87, %v50
    %v89 = vpop.permute.xlu0 %88
    %v91 = vld [vmem:[%s0] sm:$0xff]
    %vm92 = vcmask 64512
    %v94 = vsel %vm92, %v25, 0
    %v97 = vsel %vm92, %v26, 0
    %v100 = vsel %vm92, %v27, 0
    %v103 = vsel %vm92, %v28, 0
    %v106 = vsel %vm92, %v29, 0
    %v109 = vsel %vm92, %v30, 0
    %v112 = vsel %vm92, %v31, 0
    %v115 = vsel %vm92, %v32, 0
    %117 = vmatpush.msra.mxu0 0.0
    %118 = vmatpush.msra.mxu0 0.0
    %119 = vmatpush.msra.mxu0 0.0
    %120 = vmatpush.msra.mxu0 0.0
    %121 = vmatpush.msra.mxu0 0.0
    %122 = vmatpush.msra.mxu0 0.0
    %123 = vmatpush.msra.mxu0 0.0
    %124 = vmatpush.msra.mxu0 0.0
    %125 = vmatpush.msra.mxu0 0.0
    %126 = vmatpush.msra.mxu0 0.0
    %127 = vmatpush.msra.mxu0 0.0
    %128 = vmatpush.msra.mxu0 0.0
    %129 = vmatpush.msra.mxu0 0.0
    %130 = vmatpush.msra.mxu0 0.0
    %131 = vmatpush.msra.mxu0 0.0
    %132 = vmatpush.msra.mxu0 %v91
    %133 = vmatmul.f32.gmra.mxu0 %v94
    %v134 = vpop.f32.mrf.mxu0
    %v135 = vadd.f32 %v54, %v134
    %136 = vmatmul.f32.gmra.mxu0 %v97
    %v137 = vpop.f32.mrf.mxu0
    %v138 = vadd.f32 %v59, %v137
    %139 = vmatmul.f32.gmra.mxu0 %v100
    %v140 = vpop.f32.mrf.mxu0
    %141 = vmatmul.f32.gmra.mxu0 %v103
    %v142 = vpop.f32.mrf.mxu0
    %143 = vmatmul.f32.gmra.mxu0 %v106
    %v144 = vpop.f32.mrf.mxu0
    %v145 = vadd.f32 %v74, %v144
    %146 = vmatmul.f32.gmra.mxu0 %v109
    %v147 = vpop.f32.mrf.mxu0
    %v148 = vadd.f32 %v79, %v147
    %149 = vmatmul.f32.gmra.mxu0 %v112
    %v150 = vpop.f32.mrf.mxu0
    %v151 = vadd.f32 %v84, %v150
    %152 = vmatmul.f32.gmra.mxu0 %v115
    %v153 = vpop.f32.mrf.mxu0
    %v154 = vadd.f32 %v89, %v153
    %155 = vdwg.mxu0
    %v156 = vmul.f32 %v135, 0.5
    %v157 = vmul.f32 %v138, 0.5
    %v158 = vtanh.pop %v156
    %v159 = vtanh.pop %v157
    %v160 = vadd.f32 %v158, 1.0
    %v161 = vadd.f32 %v159, 1.0
    %v162 = vmul.f32 %v160, 0.5
    %v163 = vmul.f32 %v161, 0.5
    %v164 = vtanh.pop %v145
    %v165 = vtanh.pop %v148
    %v166 = vmul.f32 %v162, %v164
    %v167 = vmul.f32 %v163, %v165
    %v168 = vmul.f32 %v151, 0.5
    %v169 = vmul.f32 %v154, 0.5
    %v170 = vtanh.pop %v168
    %v171 = vtanh.pop %v169
    %v172 = vadd.f32 %v170, 1.0
    %v173 = vadd.f32 %v171, 1.0
    %v174 = vmul.f32 %v172, 0.5
    %v175 = vmul.f32 %v173, 0.5
    %v176 = vtanh.pop %v166
    %v177 = vtanh.pop %v167
    %v178 = vmul.f32 %v174, %v176
    %v179 = vmul.f32 %v175, %v177
    %s180 = scalar_lea.vmem %s0, 8
    %v181 = vld [vmem:[%s180] sm:$0xff]
    %182 = vmatpush.msra.mxu0 0.0
    %183 = vmatpush.msra.mxu0 0.0
    %184 = vmatpush.msra.mxu0 0.0
    %185 = vmatpush.msra.mxu0 0.0
    %186 = vmatpush.msra.mxu0 0.0
    %187 = vmatpush.msra.mxu0 0.0
    %188 = vmatpush.msra.mxu0 0.0
    %189 = vmatpush.msra.mxu0 0.0
    %190 = vmatpush.msra.mxu0 0.0
    %191 = vmatpush.msra.mxu0 0.0
    %192 = vmatpush.msra.mxu0 0.0
    %193 = vmatpush.msra.mxu0 0.0
    %194 = vmatpush.msra.mxu0 0.0
    %195 = vmatpush.msra.mxu0 0.0
    %196 = vmatpush.msra.mxu0 0.0
    %197 = vmatpush.msra.mxu0 %v181
    %198 = vmatmul.f32.gmra.mxu0 %v94
    %v199 = vpop.f32.mrf.mxu0
    %v200 = vadd.f32 %v54, %v199
    %201 = vmatmul.f32.gmra.mxu0 %v97
    %v202 = vpop.f32.mrf.mxu0
    %v203 = vadd.f32 %v59, %v202
    %204 = vmatmul.f32.gmra.mxu0 %v100
    %v205 = vpop.f32.mrf.mxu0
    %v206 = vadd.f32 %v64, %v205
    %207 = vmatmul.f32.gmra.mxu0 %v103
    %v208 = vpop.f32.mrf.mxu0
    %v209 = vadd.f32 %v69, %v208
    %210 = vmatmul.f32.gmra.mxu0 %v106
    %v211 = vpop.f32.mrf.mxu0
    %v212 = vadd.f32 %v74, %v211
    %213 = vmatmul.f32.gmra.mxu0 %v109
    %v214 = vpop.f32.mrf.mxu0
    %v215 = vadd.f32 %v79, %v214
    %216 = vmatmul.f32.gmra.mxu0 %v112
    %v217 = vpop.f32.mrf.mxu0
    %v218 = vadd.f32 %v84, %v217
    %219 = vmatmul.f32.gmra.mxu0 %v115
    %v220 = vpop.f32.mrf.mxu0
    %v221 = vadd.f32 %v89, %v220
    %222 = vdwg.mxu0
    %vm223 = vcmask 130048
    %v225 = vsel %vm223, %v33, 0
    %v228 = vsel %vm223, %v34, 0
    %v231 = vsel %vm223, %v35, 0
    %v234 = vsel %vm223, %v36, 0
    %v237 = vsel %vm223, %v37, 0
    %v240 = vsel %vm223, %v38, 0
    %v243 = vsel %vm223, %v39, 0
    %v246 = vsel %vm223, %v40, 0
    %248 = vmatpush.msra.mxu0 0.0
    %249 = vmatpush.msra.mxu0 0.0
    %250 = vmatpush.msra.mxu0 0.0
    %251 = vmatpush.msra.mxu0 0.0
    %252 = vmatpush.msra.mxu0 0.0
    %253 = vmatpush.msra.mxu0 0.0
    %254 = vmatpush.msra.mxu0 0.0
    %255 = vmatpush.msra.mxu0 0.0
    %256 = vmatpush.msra.mxu0 0.0
    %257 = vmatpush.msra.mxu0 0.0
    %258 = vmatpush.msra.mxu0 0.0
    %259 = vmatpush.msra.mxu0 0.0
    %260 = vmatpush.msra.mxu0 0.0
    %261 = vmatpush.msra.mxu0 0.0
    %262 = vmatpush.msra.mxu0 %v179
    %263 = vmatpush.msra.mxu0 %v178
    %264 = vmatmul.f32.gmra.mxu0 %v225
    %v265 = vpop.f32.mrf.mxu0
    %v266 = vadd.f32 0.0, %v265
    %267 = vmatmul.f32.gmra.mxu0 %v228
    %v268 = vpop.f32.mrf.mxu0
    %v269 = vadd.f32 0.0, %v268
    %270 = vmatmul.f32.gmra.mxu0 %v231
    %v271 = vpop.f32.mrf.mxu0
    %v272 = vadd.f32 0.0, %v271
    %273 = vmatmul.f32.gmra.mxu0 %v234
    %v274 = vpop.f32.mrf.mxu0
    %v275 = vadd.f32 0.0, %v274
    %276 = vmatmul.f32.gmra.mxu0 %v237
    %v277 = vpop.f32.mrf.mxu0
    %v278 = vadd.f32 0.0, %v277
    %279 = vmatmul.f32.gmra.mxu0 %v240
    %v280 = vpop.f32.mrf.mxu0
    %v281 = vadd.f32 0.0, %v280
    %282 = vmatmul.f32.gmra.mxu0 %v243
    %v283 = vpop.f32.mrf.mxu0
    %v284 = vadd.f32 0.0, %v283
    %285 = vmatmul.f32.gmra.mxu0 %v246
    %v286 = vpop.f32.mrf.mxu0
    %v287 = vadd.f32 0.0, %v286
    %288 = vdwg.mxu0
    %v289 = vadd.f32 %v200, %v266
    %v290 = vadd.f32 %v203, %v269
    %v291 = vadd.f32 %v206, %v272
    %v292 = vadd.f32 %v209, %v275
    %v293 = vadd.f32 %v212, %v278
    %v294 = vadd.f32 %v215, %v281
    %v295 = vadd.f32 %v218, %v284
    %v296 = vadd.f32 %v221, %v287
    %v297 = vmul.f32 %v289, 0.5
    %v298 = vmul.f32 %v290, 0.5
    %v299 = vmul.f32 %v291, 0.5
    %v300 = vmul.f32 %v292, 0.5
    %v301 = vtanh.pop %v297
    %v302 = vtanh.pop %v298
    %v303 = vtanh.pop %v299
    %v304 = vtanh.pop %v300
    %v305 = vadd.f32 %v301, 1.0
    %v306 = vadd.f32 %v302, 1.0
    %v307 = vadd.f32 %v303, 1.0
    %v308 = vadd.f32 %v304, 1.0
    %v309 = vmul.f32 %v305, 0.5
    %v310 = vmul.f32 %v306, 0.5
    %v311 = vmul.f32 %v307, 0.5
    %v312 = vmul.f32 %v308, 0.5
    %v313 = vtanh.pop %v293
    %v314 = vtanh.pop %v294
    %v315 = vmul.f32 %v295, 0.5
    %v316 = vmul.f32 %v296, 0.5
    %v317 = vtanh.pop %v315
    %v318 = vtanh.pop %v316
    %v319 = vadd.f32 %v317, 1.0
    %v320 = vadd.f32 %v318, 1.0
    %v321 = vmul.f32 %v319, 0.5
    %v322 = vmul.f32 %v320, 0.5
    %v323 = vmul.f32 %v311, %v166
    %v324 = vmul.f32 %v312, %v167
    %v325 = vmul.f32 %v309, %v313
    %v326 = vmul.f32 %v310, %v314
    %v327 = vadd.f32 %v323, %v325
    %v328 = vadd.f32 %v324, %v326
    %v329 = vtanh.pop %v327
    %v330 = vtanh.pop %v328
    %v331 = vmul.f32 %v321, %v329
    %v332 = vmul.f32 %v322, %v330
    %s333 = scalar_lea.vmem %s0, 16
    %v334 = vld [vmem:[%s333] sm:$0xff]
    %335 = vmatpush.msra.mxu0 0.0
    %336 = vmatpush.msra.mxu0 0.0
    %337 = vmatpush.msra.mxu0 0.0
    %338 = vmatpush.msra.mxu0 0.0
    %339 = vmatpush.msra.mxu0 0.0
    %340 = vmatpush.msra.mxu0 0.0
    %341 = vmatpush.msra.mxu0 0.0
    %342 = vmatpush.msra.mxu0 0.0
    %343 = vmatpush.msra.mxu0 0.0
    %344 = vmatpush.msra.mxu0 0.0
    %345 = vmatpush.msra.mxu0 0.0
    %346 = vmatpush.msra.mxu0 0.0
    %347 = vmatpush.msra.mxu0 0.0
    %348 = vmatpush.msra.mxu0 0.0
    %349 = vmatpush.msra.mxu0 0.0
    %350 = vmatpush.msra.mxu0 %v334
    %351 = vmatmul.f32.gmra.mxu0 %v94
    %v352 = vpop.f32.mrf.mxu0
    %v353 = vadd.f32 %v54, %v352
    %354 = vmatmul.f32.gmra.mxu0 %v97
    %v355 = vpop.f32.mrf.mxu0
    %v356 = vadd.f32 %v59, %v355
    %357 = vmatmul.f32.gmra.mxu0 %v100
    %v358 = vpop.f32.mrf.mxu0
    %v359 = vadd.f32 %v64, %v358
    %360 = vmatmul.f32.gmra.mxu0 %v103
    %v361 = vpop.f32.mrf.mxu0
    %v362 = vadd.f32 %v69, %v361
    %363 = vmatmul.f32.gmra.mxu0 %v106
    %v364 = vpop.f32.mrf.mxu0
    %v365 = vadd.f32 %v74, %v364
    %366 = vmatmul.f32.gmra.mxu0 %v109
    %v367 = vpop.f32.mrf.mxu0
    %v368 = vadd.f32 %v79, %v367
    %369 = vmatmul.f32.gmra.mxu0 %v112
    %v370 = vpop.f32.mrf.mxu0
    %v371 = vadd.f32 %v84, %v370
    %372 = vmatmul.f32.gmra.mxu0 %v115
    %v373 = vpop.f32.mrf.mxu0
    %v374 = vadd.f32 %v89, %v373
    %375 = vdwg.mxu0
    %376 = vmatpush.msra.mxu0 0.0
    %377 = vmatpush.msra.mxu0 0.0
    %378 = vmatpush.msra.mxu0 0.0
    %379 = vmatpush.msra.mxu0 0.0
    %380 = vmatpush.msra.mxu0 0.0
    %381 = vmatpush.msra.mxu0 0.0
    %382 = vmatpush.msra.mxu0 0.0
    %383 = vmatpush.msra.mxu0 0.0
    %384 = vmatpush.msra.mxu0 0.0
    %385 = vmatpush.msra.mxu0 0.0
    %386 = vmatpush.msra.mxu0 0.0
    %387 = vmatpush.msra.mxu0 0.0
    %388 = vmatpush.msra.mxu0 0.0
    %389 = vmatpush.msra.mxu0 0.0
    %390 = vmatpush.msra.mxu0 %v332
    %391 = vmatpush.msra.mxu0 %v331
    %392 = vmatmul.f32.gmra.mxu0 %v225
    %v393 = vpop.f32.mrf.mxu0
    %v394 = vadd.f32 0.0, %v393
    %395 = vmatmul.f32.gmra.mxu0 %v228
    %v396 = vpop.f32.mrf.mxu0
    %v397 = vadd.f32 0.0, %v396
    %398 = vmatmul.f32.gmra.mxu0 %v231
    %v399 = vpop.f32.mrf.mxu0
    %v400 = vadd.f32 0.0, %v399
    %401 = vmatmul.f32.gmra.mxu0 %v234
    %v402 = vpop.f32.mrf.mxu0
    %v403 = vadd.f32 0.0, %v402
    %404 = vmatmul.f32.gmra.mxu0 %v237
    %v405 = vpop.f32.mrf.mxu0
    %v406 = vadd.f32 0.0, %v405
    %407 = vmatmul.f32.gmra.mxu0 %v240
    %v408 = vpop.f32.mrf.mxu0
    %v409 = vadd.f32 0.0, %v408
    %410 = vmatmul.f32.gmra.mxu0 %v243
    %v411 = vpop.f32.mrf.mxu0
    %v412 = vadd.f32 0.0, %v411
    %413 = vmatmul.f32.gmra.mxu0 %v246
    %v414 = vpop.f32.mrf.mxu0
    %v415 = vadd.f32 0.0, %v414
    %416 = vdwg.mxu0
    %v417 = vadd.f32 %v353, %v394
    %v418 = vadd.f32 %v356, %v397
    %v419 = vadd.f32 %v359, %v400
    %v420 = vadd.f32 %v362, %v403
    %v421 = vadd.f32 %v365, %v406
    %v422 = vadd.f32 %v368, %v409
    %v423 = vadd.f32 %v371, %v412
    %v424 = vadd.f32 %v374, %v415
    %v425 = vmul.f32 %v417, 0.5
    %v426 = vmul.f32 %v418, 0.5
    %v427 = vmul.f32 %v419, 0.5
    %v428 = vmul.f32 %v420, 0.5
    %v429 = vtanh.pop %v425
    %v430 = vtanh.pop %v426
    %v431 = vtanh.pop %v427
    %v432 = vtanh.pop %v428
    %v433 = vadd.f32 %v429, 1.0
    %v434 = vadd.f32 %v430, 1.0
    %v435 = vadd.f32 %v431, 1.0
    %v436 = vadd.f32 %v432, 1.0
    %v437 = vmul.f32 %v433, 0.5
    %v438 = vmul.f32 %v434, 0.5
    %v439 = vmul.f32 %v435, 0.5
    %v440 = vmul.f32 %v436, 0.5
    %v441 = vtanh.pop %v421
    %v442 = vtanh.pop %v422
    %v443 = vmul.f32 %v423, 0.5
    %v444 = vmul.f32 %v424, 0.5
    %v445 = vtanh.pop %v443
    %v446 = vtanh.pop %v444
    %v447 = vadd.f32 %v445, 1.0
    %v448 = vadd.f32 %v446, 1.0
    %v449 = vmul.f32 %v447, 0.5
    %v450 = vmul.f32 %v448, 0.5
    %v451 = vmul.f32 %v439, %v327
    %v452 = vmul.f32 %v440, %v328
    %v453 = vmul.f32 %v437, %v441
    %v454 = vmul.f32 %v438, %v442
    %v455 = vadd.f32 %v451, %v453
    %v456 = vadd.f32 %v452, %v454
    %v457 = vtanh.pop %v455
    %v458 = vtanh.pop %v456
    %v459 = vmul.f32 %v449, %v457
    %v460 = vmul.f32 %v450, %v458
    %s461 = scalar_lea.vmem %s0, 24
    %v462 = vld [vmem:[%s461] sm:$0xff]
    %463 = vmatpush.msra.mxu0 0.0
    %464 = vmatpush.msra.mxu0 0.0
    %465 = vmatpush.msra.mxu0 0.0
    %466 = vmatpush.msra.mxu0 0.0
    %467 = vmatpush.msra.mxu0 0.0
    %468 = vmatpush.msra.mxu0 0.0
    %469 = vmatpush.msra.mxu0 0.0
    %470 = vmatpush.msra.mxu0 0.0
    %471 = vmatpush.msra.mxu0 0.0
    %472 = vmatpush.msra.mxu0 0.0
    %473 = vmatpush.msra.mxu0 0.0
    %474 = vmatpush.msra.mxu0 0.0
    %475 = vmatpush.msra.mxu0 0.0
    %476 = vmatpush.msra.mxu0 0.0
    %477 = vmatpush.msra.mxu0 0.0
    %478 = vmatpush.msra.mxu0 %v462
    %479 = vmatmul.f32.gmra.mxu0 %v94
    %v480 = vpop.f32.mrf.mxu0
    %v481 = vadd.f32 %v54, %v480
    %482 = vmatmul.f32.gmra.mxu0 %v97
    %v483 = vpop.f32.mrf.mxu0
    %v484 = vadd.f32 %v59, %v483
    %485 = vmatmul.f32.gmra.mxu0 %v100
    %v486 = vpop.f32.mrf.mxu0
    %v487 = vadd.f32 %v64, %v486
    %488 = vmatmul.f32.gmra.mxu0 %v103
    %v489 = vpop.f32.mrf.mxu0
    %v490 = vadd.f32 %v69, %v489
    %491 = vmatmul.f32.gmra.mxu0 %v106
    %v492 = vpop.f32.mrf.mxu0
    %v493 = vadd.f32 %v74, %v492
    %494 = vmatmul.f32.gmra.mxu0 %v109
    %v495 = vpop.f32.mrf.mxu0
    %v496 = vadd.f32 %v79, %v495
    %497 = vmatmul.f32.gmra.mxu0 %v112
    %v498 = vpop.f32.mrf.mxu0
    %v499 = vadd.f32 %v84, %v498
    %500 = vmatmul.f32.gmra.mxu0 %v115
    %v501 = vpop.f32.mrf.mxu0
    %v502 = vadd.f32 %v89, %v501
    %503 = vdwg.mxu0
    %504 = vmatpush.msra.mxu0 0.0
    %505 = vmatpush.msra.mxu0 0.0
    %506 = vmatpush.msra.mxu0 0.0
    %507 = vmatpush.msra.mxu0 0.0
    %508 = vmatpush.msra.mxu0 0.0
    %509 = vmatpush.msra.mxu0 0.0
    %510 = vmatpush.msra.mxu0 0.0
    %511 = vmatpush.msra.mxu0 0.0
    %512 = vmatpush.msra.mxu0 0.0
    %513 = vmatpush.msra.mxu0 0.0
    %514 = vmatpush.msra.mxu0 0.0
    %515 = vmatpush.msra.mxu0 0.0
    %516 = vmatpush.msra.mxu0 0.0
    %517 = vmatpush.msra.mxu0 0.0
    %518 = vmatpush.msra.mxu0 %v460
    %519 = vmatpush.msra.mxu0 %v459
    %520 = vmatmul.f32.gmra.mxu0 %v225
    %v521 = vpop.f32.mrf.mxu0
    %v522 = vadd.f32 0.0, %v521
    %523 = vmatmul.f32.gmra.mxu0 %v228
    %v524 = vpop.f32.mrf.mxu0
    %v525 = vadd.f32 0.0, %v524
    %526 = vmatmul.f32.gmra.mxu0 %v231
    %v527 = vpop.f32.mrf.mxu0
    %v528 = vadd.f32 0.0, %v527
    %529 = vmatmul.f32.gmra.mxu0 %v234
    %v530 = vpop.f32.mrf.mxu0
    %v531 = vadd.f32 0.0, %v530
    %532 = vmatmul.f32.gmra.mxu0 %v237
    %v533 = vpop.f32.mrf.mxu0
    %v534 = vadd.f32 0.0, %v533
    %535 = vmatmul.f32.gmra.mxu0 %v240
    %v536 = vpop.f32.mrf.mxu0
    %v537 = vadd.f32 0.0, %v536
    %538 = vmatmul.f32.gmra.mxu0 %v243
    %v539 = vpop.f32.mrf.mxu0
    %v540 = vadd.f32 0.0, %v539
    %541 = vmatmul.f32.gmra.mxu0 %v246
    %v542 = vpop.f32.mrf.mxu0
    %v543 = vadd.f32 0.0, %v542
    %544 = vdwg.mxu0
    %v545 = vadd.f32 %v481, %v522
    %v546 = vadd.f32 %v484, %v525
    %v547 = vadd.f32 %v487, %v528
    %v548 = vadd.f32 %v490, %v531
    %v549 = vadd.f32 %v493, %v534
    %v550 = vadd.f32 %v496, %v537
    %v551 = vadd.f32 %v499, %v540
    %v552 = vadd.f32 %v502, %v543
    %v553 = vmul.f32 %v545, 0.5
    %v554 = vmul.f32 %v546, 0.5
    %v555 = vmul.f32 %v547, 0.5
    %v556 = vmul.f32 %v548, 0.5
    %v557 = vtanh.pop %v553
    %v558 = vtanh.pop %v554
    %v559 = vtanh.pop %v555
    %v560 = vtanh.pop %v556
    %v561 = vadd.f32 %v557, 1.0
    %v562 = vadd.f32 %v558, 1.0
    %v563 = vadd.f32 %v559, 1.0
    %v564 = vadd.f32 %v560, 1.0
    %v565 = vmul.f32 %v561, 0.5
    %v566 = vmul.f32 %v562, 0.5
    %v567 = vmul.f32 %v563, 0.5
    %v568 = vmul.f32 %v564, 0.5
    %v569 = vtanh.pop %v549
    %v570 = vtanh.pop %v550
    %v571 = vmul.f32 %v551, 0.5
    %v572 = vmul.f32 %v552, 0.5
    %v573 = vtanh.pop %v571
    %v574 = vtanh.pop %v572
    %v575 = vadd.f32 %v573, 1.0
    %v576 = vadd.f32 %v574, 1.0
    %v577 = vmul.f32 %v575, 0.5
    %v578 = vmul.f32 %v576, 0.5
    %v579 = vmul.f32 %v567, %v455
    %v580 = vmul.f32 %v568, %v456
    %v581 = vmul.f32 %v565, %v569
    %v582 = vmul.f32 %v566, %v570
    %v583 = vadd.f32 %v579, %v581
    %v584 = vadd.f32 %v580, %v582
    %v585 = vtanh.pop %v583
    %v586 = vtanh.pop %v584
    %v587 = vmul.f32 %v577, %v585
    %v588 = vmul.f32 %v578, %v586
    %s589 = scalar_lea.vmem %s0, 32
    %v590 = vld [vmem:[%s589] sm:$0xff]
    %591 = vmatpush.msra.mxu0 0.0
    %592 = vmatpush.msra.mxu0 0.0
    %593 = vmatpush.msra.mxu0 0.0
    %594 = vmatpush.msra.mxu0 0.0
    %595 = vmatpush.msra.mxu0 0.0
    %596 = vmatpush.msra.mxu0 0.0
    %597 = vmatpush.msra.mxu0 0.0
    %598 = vmatpush.msra.mxu0 0.0
    %599 = vmatpush.msra.mxu0 0.0
    %600 = vmatpush.msra.mxu0 0.0
    %601 = vmatpush.msra.mxu0 0.0
    %602 = vmatpush.msra.mxu0 0.0
    %603 = vmatpush.msra.mxu0 0.0
    %604 = vmatpush.msra.mxu0 0.0
    %605 = vmatpush.msra.mxu0 0.0
    %606 = vmatpush.msra.mxu0 %v590
    %607 = vmatmul.f32.gmra.mxu0 %v94
    %v608 = vpop.f32.mrf.mxu0
    %v609 = vadd.f32 %v54, %v608
    %610 = vmatmul.f32.gmra.mxu0 %v97
    %v611 = vpop.f32.mrf.mxu0
    %v612 = vadd.f32 %v59, %v611
    %613 = vmatmul.f32.gmra.mxu0 %v100
    %v614 = vpop.f32.mrf.mxu0
    %v615 = vadd.f32 %v64, %v614
    %616 = vmatmul.f32.gmra.mxu0 %v103
    %v617 = vpop.f32.mrf.mxu0
    %v618 = vadd.f32 %v69, %v617
    %619 = vmatmul.f32.gmra.mxu0 %v106
    %v620 = vpop.f32.mrf.mxu0
    %v621 = vadd.f32 %v74, %v620
    %622 = vmatmul.f32.gmra.mxu0 %v109
    %v623 = vpop.f32.mrf.mxu0
    %v624 = vadd.f32 %v79, %v623
    %625 = vmatmul.f32.gmra.mxu0 %v112
    %v626 = vpop.f32.mrf.mxu0
    %v627 = vadd.f32 %v84, %v626
    %628 = vmatmul.f32.gmra.mxu0 %v115
    %v629 = vpop.f32.mrf.mxu0
    %v630 = vadd.f32 %v89, %v629
    %631 = vdwg.mxu0
    %632 = vmatpush.msra.mxu0 0.0
    %633 = vmatpush.msra.mxu0 0.0
    %634 = vmatpush.msra.mxu0 0.0
    %635 = vmatpush.msra.mxu0 0.0
    %636 = vmatpush.msra.mxu0 0.0
    %637 = vmatpush.msra.mxu0 0.0
    %638 = vmatpush.msra.mxu0 0.0
    %639 = vmatpush.msra.mxu0 0.0
    %640 = vmatpush.msra.mxu0 0.0
    %641 = vmatpush.msra.mxu0 0.0
    %642 = vmatpush.msra.mxu0 0.0
    %643 = vmatpush.msra.mxu0 0.0
    %644 = vmatpush.msra.mxu0 0.0
    %645 = vmatpush.msra.mxu0 0.0
    %646 = vmatpush.msra.mxu0 %v588
    %647 = vmatpush.msra.mxu0 %v587
    %648 = vmatmul.f32.gmra.mxu0 %v225
    %v649 = vpop.f32.mrf.mxu0
    %v650 = vadd.f32 0.0, %v649
    %651 = vmatmul.f32.gmra.mxu0 %v228
    %v652 = vpop.f32.mrf.mxu0
    %v653 = vadd.f32 0.0, %v652
    %654 = vmatmul.f32.gmra.mxu0 %v231
    %v655 = vpop.f32.mrf.mxu0
    %v656 = vadd.f32 0.0, %v655
    %657 = vmatmul.f32.gmra.mxu0 %v234
    %v658 = vpop.f32.mrf.mxu0
    %v659 = vadd.f32 0.0, %v658
    %660 = vmatmul.f32.gmra.mxu0 %v237
    %v661 = vpop.f32.mrf.mxu0
    %v662 = vadd.f32 0.0, %v661
    %663 = vmatmul.f32.gmra.mxu0 %v240
    %v664 = vpop.f32.mrf.mxu0
    %v665 = vadd.f32 0.0, %v664
    %666 = vmatmul.f32.gmra.mxu0 %v243
    %v667 = vpop.f32.mrf.mxu0
    %v668 = vadd.f32 0.0, %v667
    %669 = vmatmul.f32.gmra.mxu0 %v246
    %v670 = vpop.f32.mrf.mxu0
    %v671 = vadd.f32 0.0, %v670
    %672 = vdwg.mxu0
    %v673 = vadd.f32 %v609, %v650
    %v674 = vadd.f32 %v612, %v653
    %v675 = vadd.f32 %v615, %v656
    %v676 = vadd.f32 %v618, %v659
    %v677 = vadd.f32 %v621, %v662
    %v678 = vadd.f32 %v624, %v665
    %v679 = vadd.f32 %v627, %v668
    %v680 = vadd.f32 %v630, %v671
    %v681 = vmul.f32 %v673, 0.5
    %v682 = vmul.f32 %v674, 0.5
    %v683 = vmul.f32 %v675, 0.5
    %v684 = vmul.f32 %v676, 0.5
    %v685 = vtanh.pop %v681
    %v686 = vtanh.pop %v682
    %v687 = vtanh.pop %v683
    %v688 = vtanh.pop %v684
    %v689 = vadd.f32 %v685, 1.0
    %v690 = vadd.f32 %v686, 1.0
    %v691 = vadd.f32 %v687, 1.0
    %v692 = vadd.f32 %v688, 1.0
    %v693 = vmul.f32 %v689, 0.5
    %v694 = vmul.f32 %v690, 0.5
    %v695 = vmul.f32 %v691, 0.5
    %v696 = vmul.f32 %v692, 0.5
    %v697 = vtanh.pop %v677
    %v698 = vtanh.pop %v678
    %v699 = vmul.f32 %v679, 0.5
    %v700 = vmul.f32 %v680, 0.5
    %v701 = vtanh.pop %v699
    %v702 = vtanh.pop %v700
    %v703 = vadd.f32 %v701, 1.0
    %v704 = vadd.f32 %v702, 1.0
    %v705 = vmul.f32 %v703, 0.5
    %v706 = vmul.f32 %v704, 0.5
    %v707 = vmul.f32 %v695, %v583
    %v708 = vmul.f32 %v696, %v584
    %v709 = vmul.f32 %v693, %v697
    %v710 = vmul.f32 %v694, %v698
    %v711 = vadd.f32 %v707, %v709
    %v712 = vadd.f32 %v708, %v710
    %v713 = vtanh.pop %v711
    %v714 = vtanh.pop %v712
    %v715 = vmul.f32 %v705, %v713
    %v716 = vmul.f32 %v706, %v714
    %s717 = scalar_lea.vmem %s0, 40
    %v718 = vld [vmem:[%s717] sm:$0xff]
    %719 = vmatpush.msra.mxu0 0.0
    %720 = vmatpush.msra.mxu0 0.0
    %721 = vmatpush.msra.mxu0 0.0
    %722 = vmatpush.msra.mxu0 0.0
    %723 = vmatpush.msra.mxu0 0.0
    %724 = vmatpush.msra.mxu0 0.0
    %725 = vmatpush.msra.mxu0 0.0
    %726 = vmatpush.msra.mxu0 0.0
    %727 = vmatpush.msra.mxu0 0.0
    %728 = vmatpush.msra.mxu0 0.0
    %729 = vmatpush.msra.mxu0 0.0
    %730 = vmatpush.msra.mxu0 0.0
    %731 = vmatpush.msra.mxu0 0.0
    %732 = vmatpush.msra.mxu0 0.0
    %733 = vmatpush.msra.mxu0 0.0
    %734 = vmatpush.msra.mxu0 %v718
    %735 = vmatmul.f32.gmra.mxu0 %v94
    %v736 = vpop.f32.mrf.mxu0
    %v737 = vadd.f32 %v54, %v736
    %738 = vmatmul.f32.gmra.mxu0 %v97
    %v739 = vpop.f32.mrf.mxu0
    %v740 = vadd.f32 %v59, %v739
    %741 = vmatmul.f32.gmra.mxu0 %v100
    %v742 = vpop.f32.mrf.mxu0
    %v743 = vadd.f32 %v64, %v742
    %744 = vmatmul.f32.gmra.mxu0 %v103
    %v745 = vpop.f32.mrf.mxu0
    %v746 = vadd.f32 %v69, %v745
    %747 = vmatmul.f32.gmra.mxu0 %v106
    %v748 = vpop.f32.mrf.mxu0
    %v749 = vadd.f32 %v74, %v748
    %750 = vmatmul.f32.gmra.mxu0 %v109
    %v751 = vpop.f32.mrf.mxu0
    %v752 = vadd.f32 %v79, %v751
    %753 = vmatmul.f32.gmra.mxu0 %v112
    %v754 = vpop.f32.mrf.mxu0
    %v755 = vadd.f32 %v84, %v754
    %756 = vmatmul.f32.gmra.mxu0 %v115
    %v757 = vpop.f32.mrf.mxu0
    %v758 = vadd.f32 %v89, %v757
    %759 = vdwg.mxu0
    %760 = vmatpush.msra.mxu0 0.0
    %761 = vmatpush.msra.mxu0 0.0
    %762 = vmatpush.msra.mxu0 0.0
    %763 = vmatpush.msra.mxu0 0.0
    %764 = vmatpush.msra.mxu0 0.0
    %765 = vmatpush.msra.mxu0 0.0
    %766 = vmatpush.msra.mxu0 0.0
    %767 = vmatpush.msra.mxu0 0.0
    %768 = vmatpush.msra.mxu0 0.0
    %769 = vmatpush.msra.mxu0 0.0
    %770 = vmatpush.msra.mxu0 0.0
    %771 = vmatpush.msra.mxu0 0.0
    %772 = vmatpush.msra.mxu0 0.0
    %773 = vmatpush.msra.mxu0 0.0
    %774 = vmatpush.msra.mxu0 %v716
    %775 = vmatpush.msra.mxu0 %v715
    %776 = vmatmul.f32.gmra.mxu0 %v225
    %v777 = vpop.f32.mrf.mxu0
    %v778 = vadd.f32 0.0, %v777
    %779 = vmatmul.f32.gmra.mxu0 %v228
    %v780 = vpop.f32.mrf.mxu0
    %v781 = vadd.f32 0.0, %v780
    %782 = vmatmul.f32.gmra.mxu0 %v231
    %v783 = vpop.f32.mrf.mxu0
    %v784 = vadd.f32 0.0, %v783
    %785 = vmatmul.f32.gmra.mxu0 %v234
    %v786 = vpop.f32.mrf.mxu0
    %v787 = vadd.f32 0.0, %v786
    %788 = vmatmul.f32.gmra.mxu0 %v237
    %v789 = vpop.f32.mrf.mxu0
    %v790 = vadd.f32 0.0, %v789
    %791 = vmatmul.f32.gmra.mxu0 %v240
    %v792 = vpop.f32.mrf.mxu0
    %v793 = vadd.f32 0.0, %v792
    %794 = vmatmul.f32.gmra.mxu0 %v243
    %v795 = vpop.f32.mrf.mxu0
    %v796 = vadd.f32 0.0, %v795
    %797 = vmatmul.f32.gmra.mxu0 %v246
    %v798 = vpop.f32.mrf.mxu0
    %v799 = vadd.f32 0.0, %v798
    %800 = vdwg.mxu0
    %v801 = vadd.f32 %v737, %v778
    %v802 = vadd.f32 %v740, %v781
    %v803 = vadd.f32 %v743, %v784
    %v804 = vadd.f32 %v746, %v787
    %v805 = vadd.f32 %v749, %v790
    %v806 = vadd.f32 %v752, %v793
    %v807 = vadd.f32 %v755, %v796
    %v808 = vadd.f32 %v758, %v799
    %v809 = vmul.f32 %v801, 0.5
    %v810 = vmul.f32 %v802, 0.5
    %v811 = vmul.f32 %v803, 0.5
    %v812 = vmul.f32 %v804, 0.5
    %v813 = vtanh.pop %v809
    %v814 = vtanh.pop %v810
    %v815 = vtanh.pop %v811
    %v816 = vtanh.pop %v812
    %v817 = vadd.f32 %v813, 1.0
    %v818 = vadd.f32 %v814, 1.0
    %v819 = vadd.f32 %v815, 1.0
    %v820 = vadd.f32 %v816, 1.0
    %v821 = vmul.f32 %v817, 0.5
    %v822 = vmul.f32 %v818, 0.5
    %v823 = vmul.f32 %v819, 0.5
    %v824 = vmul.f32 %v820, 0.5
    %v825 = vtanh.pop %v805
    %v826 = vtanh.pop %v806
    %v827 = vmul.f32 %v807, 0.5
    %v828 = vmul.f32 %v808, 0.5
    %v829 = vtanh.pop %v827
    %v830 = vtanh.pop %v828
    %v831 = vadd.f32 %v829, 1.0
    %v832 = vadd.f32 %v830, 1.0
    %v833 = vmul.f32 %v831, 0.5
    %v834 = vmul.f32 %v832, 0.5
    %v835 = vmul.f32 %v823, %v711
    %v836 = vmul.f32 %v824, %v712
    %v837 = vmul.f32 %v821, %v825
    %v838 = vmul.f32 %v822, %v826
    %v839 = vadd.f32 %v835, %v837
    %v840 = vadd.f32 %v836, %v838
    %v841 = vtanh.pop %v839
    %v842 = vtanh.pop %v840
    %v843 = vmul.f32 %v833, %v841
    %v844 = vmul.f32 %v834, %v842
    %s845 = scalar_lea.vmem %s0, 48
    %v846 = vld [vmem:[%s845] sm:$0xff]
    %847 = vmatpush.msra.mxu0 0.0
    %848 = vmatpush.msra.mxu0 0.0
    %849 = vmatpush.msra.mxu0 0.0
    %850 = vmatpush.msra.mxu0 0.0
    %851 = vmatpush.msra.mxu0 0.0
    %852 = vmatpush.msra.mxu0 0.0
    %853 = vmatpush.msra.mxu0 0.0
    %854 = vmatpush.msra.mxu0 0.0
    %855 = vmatpush.msra.mxu0 0.0
    %856 = vmatpush.msra.mxu0 0.0
    %857 = vmatpush.msra.mxu0 0.0
    %858 = vmatpush.msra.mxu0 0.0
    %859 = vmatpush.msra.mxu0 0.0
    %860 = vmatpush.msra.mxu0 0.0
    %861 = vmatpush.msra.mxu0 0.0
    %862 = vmatpush.msra.mxu0 %v846
    %863 = vmatmul.f32.gmra.mxu0 %v94
    %v864 = vpop.f32.mrf.mxu0
    %v865 = vadd.f32 %v54, %v864
    %866 = vmatmul.f32.gmra.mxu0 %v97
    %v867 = vpop.f32.mrf.mxu0
    %v868 = vadd.f32 %v59, %v867
    %869 = vmatmul.f32.gmra.mxu0 %v100
    %v870 = vpop.f32.mrf.mxu0
    %v871 = vadd.f32 %v64, %v870
    %872 = vmatmul.f32.gmra.mxu0 %v103
    %v873 = vpop.f32.mrf.mxu0
    %v874 = vadd.f32 %v69, %v873
    %875 = vmatmul.f32.gmra.mxu0 %v106
    %v876 = vpop.f32.mrf.mxu0
    %v877 = vadd.f32 %v74, %v876
    %878 = vmatmul.f32.gmra.mxu0 %v109
    %v879 = vpop.f32.mrf.mxu0
    %v880 = vadd.f32 %v79, %v879
    %881 = vmatmul.f32.gmra.mxu0 %v112
    %v882 = vpop.f32.mrf.mxu0
    %v883 = vadd.f32 %v84, %v882
    %884 = vmatmul.f32.gmra.mxu0 %v115
    %v885 = vpop.f32.mrf.mxu0
    %v886 = vadd.f32 %v89, %v885
    %887 = vdwg.mxu0
    %888 = vmatpush.msra.mxu0 0.0
    %889 = vmatpush.msra.mxu0 0.0
    %890 = vmatpush.msra.mxu0 0.0
    %891 = vmatpush.msra.mxu0 0.0
    %892 = vmatpush.msra.mxu0 0.0
    %893 = vmatpush.msra.mxu0 0.0
    %894 = vmatpush.msra.mxu0 0.0
    %895 = vmatpush.msra.mxu0 0.0
    %896 = vmatpush.msra.mxu0 0.0
    %897 = vmatpush.msra.mxu0 0.0
    %898 = vmatpush.msra.mxu0 0.0
    %899 = vmatpush.msra.mxu0 0.0
    %900 = vmatpush.msra.mxu0 0.0
    %901 = vmatpush.msra.mxu0 0.0
    %902 = vmatpush.msra.mxu0 %v844
    %903 = vmatpush.msra.mxu0 %v843
    %904 = vmatmul.f32.gmra.mxu0 %v225
    %v905 = vpop.f32.mrf.mxu0
    %v906 = vadd.f32 0.0, %v905
    %907 = vmatmul.f32.gmra.mxu0 %v228
    %v908 = vpop.f32.mrf.mxu0
    %v909 = vadd.f32 0.0, %v908
    %910 = vmatmul.f32.gmra.mxu0 %v231
    %v911 = vpop.f32.mrf.mxu0
    %v912 = vadd.f32 0.0, %v911
    %913 = vmatmul.f32.gmra.mxu0 %v234
    %v914 = vpop.f32.mrf.mxu0
    %v915 = vadd.f32 0.0, %v914
    %916 = vmatmul.f32.gmra.mxu0 %v237
    %v917 = vpop.f32.mrf.mxu0
    %v918 = vadd.f32 0.0, %v917
    %919 = vmatmul.f32.gmra.mxu0 %v240
    %v920 = vpop.f32.mrf.mxu0
    %v921 = vadd.f32 0.0, %v920
    %922 = vmatmul.f32.gmra.mxu0 %v243
    %v923 = vpop.f32.mrf.mxu0
    %v924 = vadd.f32 0.0, %v923
    %925 = vmatmul.f32.gmra.mxu0 %v246
    %v926 = vpop.f32.mrf.mxu0
    %v927 = vadd.f32 0.0, %v926
    %928 = vdwg.mxu0
    %v929 = vadd.f32 %v865, %v906
    %v930 = vadd.f32 %v868, %v909
    %v931 = vadd.f32 %v871, %v912
    %v932 = vadd.f32 %v874, %v915
    %v933 = vadd.f32 %v877, %v918
    %v934 = vadd.f32 %v880, %v921
    %v935 = vadd.f32 %v883, %v924
    %v936 = vadd.f32 %v886, %v927
    %v937 = vmul.f32 %v929, 0.5
    %v938 = vmul.f32 %v930, 0.5
    %v939 = vmul.f32 %v931, 0.5
    %v940 = vmul.f32 %v932, 0.5
    %v941 = vtanh.pop %v937
    %v942 = vtanh.pop %v938
    %v943 = vtanh.pop %v939
    %v944 = vtanh.pop %v940
    %v945 = vadd.f32 %v941, 1.0
    %v946 = vadd.f32 %v942, 1.0
    %v947 = vadd.f32 %v943, 1.0
    %v948 = vadd.f32 %v944, 1.0
    %v949 = vmul.f32 %v945, 0.5
    %v950 = vmul.f32 %v946, 0.5
    %v951 = vmul.f32 %v947, 0.5
    %v952 = vmul.f32 %v948, 0.5
    %v953 = vtanh.pop %v933
    %v954 = vtanh.pop %v934
    %v955 = vmul.f32 %v935, 0.5
    %v956 = vmul.f32 %v936, 0.5
    %v957 = vtanh.pop %v955
    %v958 = vtanh.pop %v956
    %v959 = vadd.f32 %v957, 1.0
    %v960 = vadd.f32 %v958, 1.0
    %v961 = vmul.f32 %v959, 0.5
    %v962 = vmul.f32 %v960, 0.5
    %v963 = vmul.f32 %v951, %v839
    %v964 = vmul.f32 %v952, %v840
    %v965 = vmul.f32 %v949, %v953
    %v966 = vmul.f32 %v950, %v954
    %v967 = vadd.f32 %v963, %v965
    %v968 = vadd.f32 %v964, %v966
    %v969 = vtanh.pop %v967
    %v970 = vtanh.pop %v968
    %v971 = vmul.f32 %v961, %v969
    %v972 = vmul.f32 %v962, %v970
    %s973 = scalar_lea.vmem %s0, 56
    %v974 = vld [vmem:[%s973] sm:$0xff]
    %975 = vmatpush.msra.mxu0 0.0
    %976 = vmatpush.msra.mxu0 0.0
    %977 = vmatpush.msra.mxu0 0.0
    %978 = vmatpush.msra.mxu0 0.0
    %979 = vmatpush.msra.mxu0 0.0
    %980 = vmatpush.msra.mxu0 0.0
    %981 = vmatpush.msra.mxu0 0.0
    %982 = vmatpush.msra.mxu0 0.0
    %983 = vmatpush.msra.mxu0 0.0
    %984 = vmatpush.msra.mxu0 0.0
    %985 = vmatpush.msra.mxu0 0.0
    %986 = vmatpush.msra.mxu0 0.0
    %987 = vmatpush.msra.mxu0 0.0
    %988 = vmatpush.msra.mxu0 0.0
    %989 = vmatpush.msra.mxu0 0.0
    %990 = vmatpush.msra.mxu0 %v974
    %991 = vmatmul.f32.gmra.mxu0 %v94
    %v992 = vpop.f32.mrf.mxu0
    %v993 = vadd.f32 %v54, %v992
    %994 = vmatmul.f32.gmra.mxu0 %v97
    %v995 = vpop.f32.mrf.mxu0
    %v996 = vadd.f32 %v59, %v995
    %997 = vmatmul.f32.gmra.mxu0 %v100
    %v998 = vpop.f32.mrf.mxu0
    %v999 = vadd.f32 %v64, %v998
    %1000 = vmatmul.f32.gmra.mxu0 %v103
    %v1001 = vpop.f32.mrf.mxu0
    %v1002 = vadd.f32 %v69, %v1001
    %1003 = vmatmul.f32.gmra.mxu0 %v106
    %v1004 = vpop.f32.mrf.mxu0
    %v1005 = vadd.f32 %v74, %v1004
    %1006 = vmatmul.f32.gmra.mxu0 %v109
    %v1007 = vpop.f32.mrf.mxu0
    %v1008 = vadd.f32 %v79, %v1007
    %1009 = vmatmul.f32.gmra.mxu0 %v112
    %v1010 = vpop.f32.mrf.mxu0
    %v1011 = vadd.f32 %v84, %v1010
    %1012 = vmatmul.f32.gmra.mxu0 %v115
    %v1013 = vpop.f32.mrf.mxu0
    %v1014 = vadd.f32 %v89, %v1013
    %1015 = vdwg.mxu0
    %1016 = vmatpush.msra.mxu0 0.0
    %1017 = vmatpush.msra.mxu0 0.0
    %1018 = vmatpush.msra.mxu0 0.0
    %1019 = vmatpush.msra.mxu0 0.0
    %1020 = vmatpush.msra.mxu0 0.0
    %1021 = vmatpush.msra.mxu0 0.0
    %1022 = vmatpush.msra.mxu0 0.0
    %1023 = vmatpush.msra.mxu0 0.0
    %1024 = vmatpush.msra.mxu0 0.0
    %1025 = vmatpush.msra.mxu0 0.0
    %1026 = vmatpush.msra.mxu0 0.0
    %1027 = vmatpush.msra.mxu0 0.0
    %1028 = vmatpush.msra.mxu0 0.0
    %1029 = vmatpush.msra.mxu0 0.0
    %1030 = vmatpush.msra.mxu0 %v972
    %1031 = vmatpush.msra.mxu0 %v971
    %1032 = vmatmul.f32.gmra.mxu0 %v225
    %v1033 = vpop.f32.mrf.mxu0
    %v1034 = vadd.f32 0.0, %v1033
    %1035 = vmatmul.f32.gmra.mxu0 %v228
    %v1036 = vpop.f32.mrf.mxu0
    %v1037 = vadd.f32 0.0, %v1036
    %1038 = vmatmul.f32.gmra.mxu0 %v231
    %v1039 = vpop.f32.mrf.mxu0
    %v1040 = vadd.f32 0.0, %v1039
    %1041 = vmatmul.f32.gmra.mxu0 %v234
    %v1042 = vpop.f32.mrf.mxu0
    %v1043 = vadd.f32 0.0, %v1042
    %1044 = vmatmul.f32.gmra.mxu0 %v237
    %v1045 = vpop.f32.mrf.mxu0
    %v1046 = vadd.f32 0.0, %v1045
    %1047 = vmatmul.f32.gmra.mxu0 %v240
    %v1048 = vpop.f32.mrf.mxu0
    %v1049 = vadd.f32 0.0, %v1048
    %1050 = vmatmul.f32.gmra.mxu0 %v243
    %v1051 = vpop.f32.mrf.mxu0
    %v1052 = vadd.f32 0.0, %v1051
    %1053 = vmatmul.f32.gmra.mxu0 %v246
    %v1054 = vpop.f32.mrf.mxu0
    %v1055 = vadd.f32 0.0, %v1054
    %1056 = vdwg.mxu0
    %v1057 = vadd.f32 %v993, %v1034
    %v1058 = vadd.f32 %v996, %v1037
    %v1059 = vadd.f32 %v999, %v1040
    %v1060 = vadd.f32 %v1002, %v1043
    %v1061 = vadd.f32 %v1005, %v1046
    %v1062 = vadd.f32 %v1008, %v1049
    %v1063 = vadd.f32 %v1011, %v1052
    %v1064 = vadd.f32 %v1014, %v1055
    %v1065 = vmul.f32 %v1057, 0.5
    %v1066 = vmul.f32 %v1058, 0.5
    %v1067 = vmul.f32 %v1059, 0.5
    %v1068 = vmul.f32 %v1060, 0.5
    %v1069 = vtanh.pop %v1065
    %v1070 = vtanh.pop %v1066
    %v1071 = vtanh.pop %v1067
    %v1072 = vtanh.pop %v1068
    %v1073 = vadd.f32 %v1069, 1.0
    %v1074 = vadd.f32 %v1070, 1.0
    %v1075 = vadd.f32 %v1071, 1.0
    %v1076 = vadd.f32 %v1072, 1.0
    %v1077 = vmul.f32 %v1073, 0.5
    %v1078 = vmul.f32 %v1074, 0.5
    %v1079 = vmul.f32 %v1075, 0.5
    %v1080 = vmul.f32 %v1076, 0.5
    %v1081 = vtanh.pop %v1061
    %v1082 = vtanh.pop %v1062
    %v1083 = vmul.f32 %v1063, 0.5
    %v1084 = vmul.f32 %v1064, 0.5
    %v1085 = vtanh.pop %v1083
    %v1086 = vtanh.pop %v1084
    %v1087 = vadd.f32 %v1085, 1.0
    %v1088 = vadd.f32 %v1086, 1.0
    %v1089 = vmul.f32 %v1087, 0.5
    %v1090 = vmul.f32 %v1088, 0.5
    %v1091 = vmul.f32 %v1079, %v967
    %v1092 = vmul.f32 %v1080, %v968
    %v1093 = vmul.f32 %v1077, %v1081
    %v1094 = vmul.f32 %v1078, %v1082
    %v1095 = vadd.f32 %v1091, %v1093
    %v1096 = vadd.f32 %v1092, %v1094
    %v1097 = vtanh.pop %v1095
    %v1098 = vtanh.pop %v1096
    %v1099 = vmul.f32 %v1089, %v1097
    %v1100 = vmul.f32 %v1090, %v1098
    %s1101 = scalar_lea.vmem %s0, 64
    %v1102 = vld [vmem:[%s1101] sm:$0xff]
    %1103 = vmatpush.msra.mxu0 0.0
    %1104 = vmatpush.msra.mxu0 0.0
    %1105 = vmatpush.msra.mxu0 0.0
    %1106 = vmatpush.msra.mxu0 0.0
    %1107 = vmatpush.msra.mxu0 0.0
    %1108 = vmatpush.msra.mxu0 0.0
    %1109 = vmatpush.msra.mxu0 0.0
    %1110 = vmatpush.msra.mxu0 0.0
    %1111 = vmatpush.msra.mxu0 0.0
    %1112 = vmatpush.msra.mxu0 0.0
    %1113 = vmatpush.msra.mxu0 0.0
    %1114 = vmatpush.msra.mxu0 0.0
    %1115 = vmatpush.msra.mxu0 0.0
    %1116 = vmatpush.msra.mxu0 0.0
    %1117 = vmatpush.msra.mxu0 0.0
    %1118 = vmatpush.msra.mxu0 %v1102
    %1119 = vmatmul.f32.gmra.mxu0 %v94
    %v1120 = vpop.f32.mrf.mxu0
    %v1121 = vadd.f32 %v54, %v1120
    %1122 = vmatmul.f32.gmra.mxu0 %v97
    %v1123 = vpop.f32.mrf.mxu0
    %v1124 = vadd.f32 %v59, %v1123
    %1125 = vmatmul.f32.gmra.mxu0 %v100
    %v1126 = vpop.f32.mrf.mxu0
    %v1127 = vadd.f32 %v64, %v1126
    %1128 = vmatmul.f32.gmra.mxu0 %v103
    %v1129 = vpop.f32.mrf.mxu0
    %v1130 = vadd.f32 %v69, %v1129
    %1131 = vmatmul.f32.gmra.mxu0 %v106
    %v1132 = vpop.f32.mrf.mxu0
    %v1133 = vadd.f32 %v74, %v1132
    %1134 = vmatmul.f32.gmra.mxu0 %v109
    %v1135 = vpop.f32.mrf.mxu0
    %v1136 = vadd.f32 %v79, %v1135
    %1137 = vmatmul.f32.gmra.mxu0 %v112
    %v1138 = vpop.f32.mrf.mxu0
    %v1139 = vadd.f32 %v84, %v1138
    %1140 = vmatmul.f32.gmra.mxu0 %v115
    %v1141 = vpop.f32.mrf.mxu0
    %v1142 = vadd.f32 %v89, %v1141
    %1143 = vdwg.mxu0
    %1144 = vmatpush.msra.mxu0 0.0
    %1145 = vmatpush.msra.mxu0 0.0
    %1146 = vmatpush.msra.mxu0 0.0
    %1147 = vmatpush.msra.mxu0 0.0
    %1148 = vmatpush.msra.mxu0 0.0
    %1149 = vmatpush.msra.mxu0 0.0
    %1150 = vmatpush.msra.mxu0 0.0
    %1151 = vmatpush.msra.mxu0 0.0
    %1152 = vmatpush.msra.mxu0 0.0
    %1153 = vmatpush.msra.mxu0 0.0
    %1154 = vmatpush.msra.mxu0 0.0
    %1155 = vmatpush.msra.mxu0 0.0
    %1156 = vmatpush.msra.mxu0 0.0
    %1157 = vmatpush.msra.mxu0 0.0
    %1158 = vmatpush.msra.mxu0 %v1100
    %1159 = vmatpush.msra.mxu0 %v1099
    %1160 = vmatmul.f32.gmra.mxu0 %v225
    %v1161 = vpop.f32.mrf.mxu0
    %v1162 = vadd.f32 0.0, %v1161
    %1163 = vmatmul.f32.gmra.mxu0 %v228
    %v1164 = vpop.f32.mrf.mxu0
    %v1165 = vadd.f32 0.0, %v1164
    %1166 = vmatmul.f32.gmra.mxu0 %v231
    %v1167 = vpop.f32.mrf.mxu0
    %v1168 = vadd.f32 0.0, %v1167
    %1169 = vmatmul.f32.gmra.mxu0 %v234
    %v1170 = vpop.f32.mrf.mxu0
    %v1171 = vadd.f32 0.0, %v1170
    %1172 = vmatmul.f32.gmra.mxu0 %v237
    %v1173 = vpop.f32.mrf.mxu0
    %v1174 = vadd.f32 0.0, %v1173
    %1175 = vmatmul.f32.gmra.mxu0 %v240
    %v1176 = vpop.f32.mrf.mxu0
    %v1177 = vadd.f32 0.0, %v1176
    %1178 = vmatmul.f32.gmra.mxu0 %v243
    %v1179 = vpop.f32.mrf.mxu0
    %v1180 = vadd.f32 0.0, %v1179
    %1181 = vmatmul.f32.gmra.mxu0 %v246
    %v1182 = vpop.f32.mrf.mxu0
    %v1183 = vadd.f32 0.0, %v1182
    %1184 = vdwg.mxu0
    %v1185 = vadd.f32 %v1121, %v1162
    %v1186 = vadd.f32 %v1124, %v1165
    %v1187 = vadd.f32 %v1127, %v1168
    %v1188 = vadd.f32 %v1130, %v1171
    %v1189 = vadd.f32 %v1133, %v1174
    %v1190 = vadd.f32 %v1136, %v1177
    %v1191 = vadd.f32 %v1139, %v1180
    %v1192 = vadd.f32 %v1142, %v1183
    %v1193 = vmul.f32 %v1185, 0.5
    %v1194 = vmul.f32 %v1186, 0.5
    %v1195 = vmul.f32 %v1187, 0.5
    %v1196 = vmul.f32 %v1188, 0.5
    %v1197 = vtanh.pop %v1193
    %v1198 = vtanh.pop %v1194
    %v1199 = vtanh.pop %v1195
    %v1200 = vtanh.pop %v1196
    %v1201 = vadd.f32 %v1197, 1.0
    %v1202 = vadd.f32 %v1198, 1.0
    %v1203 = vadd.f32 %v1199, 1.0
    %v1204 = vadd.f32 %v1200, 1.0
    %v1205 = vmul.f32 %v1201, 0.5
    %v1206 = vmul.f32 %v1202, 0.5
    %v1207 = vmul.f32 %v1203, 0.5
    %v1208 = vmul.f32 %v1204, 0.5
    %v1209 = vtanh.pop %v1189
    %v1210 = vtanh.pop %v1190
    %v1211 = vmul.f32 %v1191, 0.5
    %v1212 = vmul.f32 %v1192, 0.5
    %v1213 = vtanh.pop %v1211
    %v1214 = vtanh.pop %v1212
    %v1215 = vadd.f32 %v1213, 1.0
    %v1216 = vadd.f32 %v1214, 1.0
    %v1217 = vmul.f32 %v1215, 0.5
    %v1218 = vmul.f32 %v1216, 0.5
    %v1219 = vmul.f32 %v1207, %v1095
    %v1220 = vmul.f32 %v1208, %v1096
    %v1221 = vmul.f32 %v1205, %v1209
    %v1222 = vmul.f32 %v1206, %v1210
    %v1223 = vadd.f32 %v1219, %v1221
    %v1224 = vadd.f32 %v1220, %v1222
    %v1225 = vtanh.pop %v1223
    %v1226 = vtanh.pop %v1224
    %v1227 = vmul.f32 %v1217, %v1225
    %v1228 = vmul.f32 %v1218, %v1226
    %s1229 = scalar_lea.vmem %s0, 72
    %v1230 = vld [vmem:[%s1229] sm:$0xff]
    %1231 = vmatpush.msra.mxu0 0.0
    %1232 = vmatpush.msra.mxu0 0.0
    %1233 = vmatpush.msra.mxu0 0.0
    %1234 = vmatpush.msra.mxu0 0.0
    %1235 = vmatpush.msra.mxu0 0.0
    %1236 = vmatpush.msra.mxu0 0.0
    %1237 = vmatpush.msra.mxu0 0.0
    %1238 = vmatpush.msra.mxu0 0.0
    %1239 = vmatpush.msra.mxu0 0.0
    %1240 = vmatpush.msra.mxu0 0.0
    %1241 = vmatpush.msra.mxu0 0.0
    %1242 = vmatpush.msra.mxu0 0.0
    %1243 = vmatpush.msra.mxu0 0.0
    %1244 = vmatpush.msra.mxu0 0.0
    %1245 = vmatpush.msra.mxu0 0.0
    %1246 = vmatpush.msra.mxu0 %v1230
    %1247 = vmatmul.f32.gmra.mxu0 %v94
    %v1248 = vpop.f32.mrf.mxu0
    %v1249 = vadd.f32 %v54, %v1248
    %1250 = vmatmul.f32.gmra.mxu0 %v97
    %v1251 = vpop.f32.mrf.mxu0
    %v1252 = vadd.f32 %v59, %v1251
    %1253 = vmatmul.f32.gmra.mxu0 %v100
    %v1254 = vpop.f32.mrf.mxu0
    %v1255 = vadd.f32 %v64, %v1254
    %1256 = vmatmul.f32.gmra.mxu0 %v103
    %v1257 = vpop.f32.mrf.mxu0
    %v1258 = vadd.f32 %v69, %v1257
    %1259 = vmatmul.f32.gmra.mxu0 %v106
    %v1260 = vpop.f32.mrf.mxu0
    %v1261 = vadd.f32 %v74, %v1260
    %1262 = vmatmul.f32.gmra.mxu0 %v109
    %v1263 = vpop.f32.mrf.mxu0
    %v1264 = vadd.f32 %v79, %v1263
    %1265 = vmatmul.f32.gmra.mxu0 %v112
    %v1266 = vpop.f32.mrf.mxu0
    %v1267 = vadd.f32 %v84, %v1266
    %1268 = vmatmul.f32.gmra.mxu0 %v115
    %v1269 = vpop.f32.mrf.mxu0
    %v1270 = vadd.f32 %v89, %v1269
    %1271 = vdwg.mxu0
    %1272 = vmatpush.msra.mxu0 0.0
    %1273 = vmatpush.msra.mxu0 0.0
    %1274 = vmatpush.msra.mxu0 0.0
    %1275 = vmatpush.msra.mxu0 0.0
    %1276 = vmatpush.msra.mxu0 0.0
    %1277 = vmatpush.msra.mxu0 0.0
    %1278 = vmatpush.msra.mxu0 0.0
    %1279 = vmatpush.msra.mxu0 0.0
    %1280 = vmatpush.msra.mxu0 0.0
    %1281 = vmatpush.msra.mxu0 0.0
    %1282 = vmatpush.msra.mxu0 0.0
    %1283 = vmatpush.msra.mxu0 0.0
    %1284 = vmatpush.msra.mxu0 0.0
    %1285 = vmatpush.msra.mxu0 0.0
    %1286 = vmatpush.msra.mxu0 %v1228
    %1287 = vmatpush.msra.mxu0 %v1227
    %1288 = vmatmul.f32.gmra.mxu0 %v225
    %v1289 = vpop.f32.mrf.mxu0
    %v1290 = vadd.f32 0.0, %v1289
    %1291 = vmatmul.f32.gmra.mxu0 %v228
    %v1292 = vpop.f32.mrf.mxu0
    %v1293 = vadd.f32 0.0, %v1292
    %1294 = vmatmul.f32.gmra.mxu0 %v231
    %v1295 = vpop.f32.mrf.mxu0
    %v1296 = vadd.f32 0.0, %v1295
    %1297 = vmatmul.f32.gmra.mxu0 %v234
    %v1298 = vpop.f32.mrf.mxu0
    %v1299 = vadd.f32 0.0, %v1298
    %1300 = vmatmul.f32.gmra.mxu0 %v237
    %v1301 = vpop.f32.mrf.mxu0
    %v1302 = vadd.f32 0.0, %v1301
    %1303 = vmatmul.f32.gmra.mxu0 %v240
    %v1304 = vpop.f32.mrf.mxu0
    %v1305 = vadd.f32 0.0, %v1304
    %1306 = vmatmul.f32.gmra.mxu0 %v243
    %v1307 = vpop.f32.mrf.mxu0
    %v1308 = vadd.f32 0.0, %v1307
    %1309 = vmatmul.f32.gmra.mxu0 %v246
    %v1310 = vpop.f32.mrf.mxu0
    %v1311 = vadd.f32 0.0, %v1310
    %1312 = vdwg.mxu0
    %v1313 = vadd.f32 %v1249, %v1290
    %v1314 = vadd.f32 %v1252, %v1293
    %v1315 = vadd.f32 %v1255, %v1296
    %v1316 = vadd.f32 %v1258, %v1299
    %v1317 = vadd.f32 %v1261, %v1302
    %v1318 = vadd.f32 %v1264, %v1305
    %v1319 = vadd.f32 %v1267, %v1308
    %v1320 = vadd.f32 %v1270, %v1311
    %v1321 = vmul.f32 %v1313, 0.5
    %v1322 = vmul.f32 %v1314, 0.5
    %v1323 = vmul.f32 %v1315, 0.5
    %v1324 = vmul.f32 %v1316, 0.5
    %v1325 = vtanh.pop %v1321
    %v1326 = vtanh.pop %v1322
    %v1327 = vtanh.pop %v1323
    %v1328 = vtanh.pop %v1324
    %v1329 = vadd.f32 %v1325, 1.0
    %v1330 = vadd.f32 %v1326, 1.0
    %v1331 = vadd.f32 %v1327, 1.0
    %v1332 = vadd.f32 %v1328, 1.0
    %v1333 = vmul.f32 %v1329, 0.5
    %v1334 = vmul.f32 %v1330, 0.5
    %v1335 = vmul.f32 %v1331, 0.5
    %v1336 = vmul.f32 %v1332, 0.5
    %v1337 = vtanh.pop %v1317
    %v1338 = vtanh.pop %v1318
    %v1339 = vmul.f32 %v1319, 0.5
    %v1340 = vmul.f32 %v1320, 0.5
    %v1341 = vtanh.pop %v1339
    %v1342 = vtanh.pop %v1340
    %v1343 = vadd.f32 %v1341, 1.0
    %v1344 = vadd.f32 %v1342, 1.0
    %v1345 = vmul.f32 %v1343, 0.5
    %v1346 = vmul.f32 %v1344, 0.5
    %v1347 = vmul.f32 %v1335, %v1223
    %v1348 = vmul.f32 %v1336, %v1224
    %v1349 = vmul.f32 %v1333, %v1337
    %v1350 = vmul.f32 %v1334, %v1338
    %v1351 = vadd.f32 %v1347, %v1349
    %v1352 = vadd.f32 %v1348, %v1350
    %v1353 = vtanh.pop %v1351
    %v1354 = vtanh.pop %v1352
    %v1355 = vmul.f32 %v1345, %v1353
    %v1356 = vmul.f32 %v1346, %v1354
    %s1357 = scalar_lea.vmem %s0, 80
    %v1358 = vld [vmem:[%s1357] sm:$0xff]
    %1359 = vmatpush.msra.mxu0 0.0
    %1360 = vmatpush.msra.mxu0 0.0
    %1361 = vmatpush.msra.mxu0 0.0
    %1362 = vmatpush.msra.mxu0 0.0
    %1363 = vmatpush.msra.mxu0 0.0
    %1364 = vmatpush.msra.mxu0 0.0
    %1365 = vmatpush.msra.mxu0 0.0
    %1366 = vmatpush.msra.mxu0 0.0
    %1367 = vmatpush.msra.mxu0 0.0
    %1368 = vmatpush.msra.mxu0 0.0
    %1369 = vmatpush.msra.mxu0 0.0
    %1370 = vmatpush.msra.mxu0 0.0
    %1371 = vmatpush.msra.mxu0 0.0
    %1372 = vmatpush.msra.mxu0 0.0
    %1373 = vmatpush.msra.mxu0 0.0
    %1374 = vmatpush.msra.mxu0 %v1358
    %1375 = vmatmul.f32.gmra.mxu0 %v94
    %v1376 = vpop.f32.mrf.mxu0
    %v1377 = vadd.f32 %v54, %v1376
    %1378 = vmatmul.f32.gmra.mxu0 %v97
    %v1379 = vpop.f32.mrf.mxu0
    %v1380 = vadd.f32 %v59, %v1379
    %1381 = vmatmul.f32.gmra.mxu0 %v100
    %v1382 = vpop.f32.mrf.mxu0
    %v1383 = vadd.f32 %v64, %v1382
    %1384 = vmatmul.f32.gmra.mxu0 %v103
    %v1385 = vpop.f32.mrf.mxu0
    %v1386 = vadd.f32 %v69, %v1385
    %1387 = vmatmul.f32.gmra.mxu0 %v106
    %v1388 = vpop.f32.mrf.mxu0
    %v1389 = vadd.f32 %v74, %v1388
    %1390 = vmatmul.f32.gmra.mxu0 %v109
    %v1391 = vpop.f32.mrf.mxu0
    %v1392 = vadd.f32 %v79, %v1391
    %1393 = vmatmul.f32.gmra.mxu0 %v112
    %v1394 = vpop.f32.mrf.mxu0
    %v1395 = vadd.f32 %v84, %v1394
    %1396 = vmatmul.f32.gmra.mxu0 %v115
    %v1397 = vpop.f32.mrf.mxu0
    %v1398 = vadd.f32 %v89, %v1397
    %1399 = vdwg.mxu0
    %1400 = vmatpush.msra.mxu0 0.0
    %1401 = vmatpush.msra.mxu0 0.0
    %1402 = vmatpush.msra.mxu0 0.0
    %1403 = vmatpush.msra.mxu0 0.0
    %1404 = vmatpush.msra.mxu0 0.0
    %1405 = vmatpush.msra.mxu0 0.0
    %1406 = vmatpush.msra.mxu0 0.0
    %1407 = vmatpush.msra.mxu0 0.0
    %1408 = vmatpush.msra.mxu0 0.0
    %1409 = vmatpush.msra.mxu0 0.0
    %1410 = vmatpush.msra.mxu0 0.0
    %1411 = vmatpush.msra.mxu0 0.0
    %1412 = vmatpush.msra.mxu0 0.0
    %1413 = vmatpush.msra.mxu0 0.0
    %1414 = vmatpush.msra.mxu0 %v1356
    %1415 = vmatpush.msra.mxu0 %v1355
    %1416 = vmatmul.f32.gmra.mxu0 %v225
    %v1417 = vpop.f32.mrf.mxu0
    %v1418 = vadd.f32 0.0, %v1417
    %1419 = vmatmul.f32.gmra.mxu0 %v228
    %v1420 = vpop.f32.mrf.mxu0
    %v1421 = vadd.f32 0.0, %v1420
    %1422 = vmatmul.f32.gmra.mxu0 %v231
    %v1423 = vpop.f32.mrf.mxu0
    %v1424 = vadd.f32 0.0, %v1423
    %1425 = vmatmul.f32.gmra.mxu0 %v234
    %v1426 = vpop.f32.mrf.mxu0
    %v1427 = vadd.f32 0.0, %v1426
    %1428 = vmatmul.f32.gmra.mxu0 %v237
    %v1429 = vpop.f32.mrf.mxu0
    %v1430 = vadd.f32 0.0, %v1429
    %1431 = vmatmul.f32.gmra.mxu0 %v240
    %v1432 = vpop.f32.mrf.mxu0
    %v1433 = vadd.f32 0.0, %v1432
    %1434 = vmatmul.f32.gmra.mxu0 %v243
    %v1435 = vpop.f32.mrf.mxu0
    %v1436 = vadd.f32 0.0, %v1435
    %1437 = vmatmul.f32.gmra.mxu0 %v246
    %v1438 = vpop.f32.mrf.mxu0
    %v1439 = vadd.f32 0.0, %v1438
    %1440 = vdwg.mxu0
    %v1441 = vadd.f32 %v1377, %v1418
    %v1442 = vadd.f32 %v1380, %v1421
    %v1443 = vadd.f32 %v1383, %v1424
    %v1444 = vadd.f32 %v1386, %v1427
    %v1445 = vadd.f32 %v1389, %v1430
    %v1446 = vadd.f32 %v1392, %v1433
    %v1447 = vadd.f32 %v1395, %v1436
    %v1448 = vadd.f32 %v1398, %v1439
    %v1449 = vmul.f32 %v1441, 0.5
    %v1450 = vmul.f32 %v1442, 0.5
    %v1451 = vmul.f32 %v1443, 0.5
    %v1452 = vmul.f32 %v1444, 0.5
    %v1453 = vtanh.pop %v1449
    %v1454 = vtanh.pop %v1450
    %v1455 = vtanh.pop %v1451
    %v1456 = vtanh.pop %v1452
    %v1457 = vadd.f32 %v1453, 1.0
    %v1458 = vadd.f32 %v1454, 1.0
    %v1459 = vadd.f32 %v1455, 1.0
    %v1460 = vadd.f32 %v1456, 1.0
    %v1461 = vmul.f32 %v1457, 0.5
    %v1462 = vmul.f32 %v1458, 0.5
    %v1463 = vmul.f32 %v1459, 0.5
    %v1464 = vmul.f32 %v1460, 0.5
    %v1465 = vtanh.pop %v1445
    %v1466 = vtanh.pop %v1446
    %v1467 = vmul.f32 %v1447, 0.5
    %v1468 = vmul.f32 %v1448, 0.5
    %v1469 = vtanh.pop %v1467
    %v1470 = vtanh.pop %v1468
    %v1471 = vadd.f32 %v1469, 1.0
    %v1472 = vadd.f32 %v1470, 1.0
    %v1473 = vmul.f32 %v1471, 0.5
    %v1474 = vmul.f32 %v1472, 0.5
    %v1475 = vmul.f32 %v1463, %v1351
    %v1476 = vmul.f32 %v1464, %v1352
    %v1477 = vmul.f32 %v1461, %v1465
    %v1478 = vmul.f32 %v1462, %v1466
    %v1479 = vadd.f32 %v1475, %v1477
    %v1480 = vadd.f32 %v1476, %v1478
    %v1481 = vtanh.pop %v1479
    %v1482 = vtanh.pop %v1480
    %v1483 = vmul.f32 %v1473, %v1481
    %v1484 = vmul.f32 %v1474, %v1482
    %s1485 = scalar_lea.vmem %s0, 88
    %v1486 = vld [vmem:[%s1485] sm:$0xff]
    %1487 = vmatpush.msra.mxu0 0.0
    %1488 = vmatpush.msra.mxu0 0.0
    %1489 = vmatpush.msra.mxu0 0.0
    %1490 = vmatpush.msra.mxu0 0.0
    %1491 = vmatpush.msra.mxu0 0.0
    %1492 = vmatpush.msra.mxu0 0.0
    %1493 = vmatpush.msra.mxu0 0.0
    %1494 = vmatpush.msra.mxu0 0.0
    %1495 = vmatpush.msra.mxu0 0.0
    %1496 = vmatpush.msra.mxu0 0.0
    %1497 = vmatpush.msra.mxu0 0.0
    %1498 = vmatpush.msra.mxu0 0.0
    %1499 = vmatpush.msra.mxu0 0.0
    %1500 = vmatpush.msra.mxu0 0.0
    %1501 = vmatpush.msra.mxu0 0.0
    %1502 = vmatpush.msra.mxu0 %v1486
    %1503 = vmatmul.f32.gmra.mxu0 %v94
    %v1504 = vpop.f32.mrf.mxu0
    %v1505 = vadd.f32 %v54, %v1504
    %1506 = vmatmul.f32.gmra.mxu0 %v97
    %v1507 = vpop.f32.mrf.mxu0
    %v1508 = vadd.f32 %v59, %v1507
    %1509 = vmatmul.f32.gmra.mxu0 %v100
    %v1510 = vpop.f32.mrf.mxu0
    %v1511 = vadd.f32 %v64, %v1510
    %1512 = vmatmul.f32.gmra.mxu0 %v103
    %v1513 = vpop.f32.mrf.mxu0
    %v1514 = vadd.f32 %v69, %v1513
    %1515 = vmatmul.f32.gmra.mxu0 %v106
    %v1516 = vpop.f32.mrf.mxu0
    %v1517 = vadd.f32 %v74, %v1516
    %1518 = vmatmul.f32.gmra.mxu0 %v109
    %v1519 = vpop.f32.mrf.mxu0
    %v1520 = vadd.f32 %v79, %v1519
    %1521 = vmatmul.f32.gmra.mxu0 %v112
    %v1522 = vpop.f32.mrf.mxu0
    %v1523 = vadd.f32 %v84, %v1522
    %1524 = vmatmul.f32.gmra.mxu0 %v115
    %v1525 = vpop.f32.mrf.mxu0
    %v1526 = vadd.f32 %v89, %v1525
    %1527 = vdwg.mxu0
    %1528 = vmatpush.msra.mxu0 0.0
    %1529 = vmatpush.msra.mxu0 0.0
    %1530 = vmatpush.msra.mxu0 0.0
    %1531 = vmatpush.msra.mxu0 0.0
    %1532 = vmatpush.msra.mxu0 0.0
    %1533 = vmatpush.msra.mxu0 0.0
    %1534 = vmatpush.msra.mxu0 0.0
    %1535 = vmatpush.msra.mxu0 0.0
    %1536 = vmatpush.msra.mxu0 0.0
    %1537 = vmatpush.msra.mxu0 0.0
    %1538 = vmatpush.msra.mxu0 0.0
    %1539 = vmatpush.msra.mxu0 0.0
    %1540 = vmatpush.msra.mxu0 0.0
    %1541 = vmatpush.msra.mxu0 0.0
    %1542 = vmatpush.msra.mxu0 %v1484
    %1543 = vmatpush.msra.mxu0 %v1483
    %1544 = vmatmul.f32.gmra.mxu0 %v225
    %v1545 = vpop.f32.mrf.mxu0
    %v1546 = vadd.f32 0.0, %v1545
    %1547 = vmatmul.f32.gmra.mxu0 %v228
    %v1548 = vpop.f32.mrf.mxu0
    %v1549 = vadd.f32 0.0, %v1548
    %1550 = vmatmul.f32.gmra.mxu0 %v231
    %v1551 = vpop.f32.mrf.mxu0
    %v1552 = vadd.f32 0.0, %v1551
    %1553 = vmatmul.f32.gmra.mxu0 %v234
    %v1554 = vpop.f32.mrf.mxu0
    %v1555 = vadd.f32 0.0, %v1554
    %1556 = vmatmul.f32.gmra.mxu0 %v237
    %v1557 = vpop.f32.mrf.mxu0
    %v1558 = vadd.f32 0.0, %v1557
    %1559 = vmatmul.f32.gmra.mxu0 %v240
    %v1560 = vpop.f32.mrf.mxu0
    %v1561 = vadd.f32 0.0, %v1560
    %1562 = vmatmul.f32.gmra.mxu0 %v243
    %v1563 = vpop.f32.mrf.mxu0
    %v1564 = vadd.f32 0.0, %v1563
    %1565 = vmatmul.f32.gmra.mxu0 %v246
    %v1566 = vpop.f32.mrf.mxu0
    %v1567 = vadd.f32 0.0, %v1566
    %1568 = vdwg.mxu0
    %v1569 = vadd.f32 %v1505, %v1546
    %v1570 = vadd.f32 %v1508, %v1549
    %v1571 = vadd.f32 %v1511, %v1552
    %v1572 = vadd.f32 %v1514, %v1555
    %v1573 = vadd.f32 %v1517, %v1558
    %v1574 = vadd.f32 %v1520, %v1561
    %v1575 = vadd.f32 %v1523, %v1564
    %v1576 = vadd.f32 %v1526, %v1567
    %v1577 = vmul.f32 %v1569, 0.5
    %v1578 = vmul.f32 %v1570, 0.5
    %v1579 = vmul.f32 %v1571, 0.5
    %v1580 = vmul.f32 %v1572, 0.5
    %v1581 = vtanh.pop %v1577
    %v1582 = vtanh.pop %v1578
    %v1583 = vtanh.pop %v1579
    %v1584 = vtanh.pop %v1580
    %v1585 = vadd.f32 %v1581, 1.0
    %v1586 = vadd.f32 %v1582, 1.0
    %v1587 = vadd.f32 %v1583, 1.0
    %v1588 = vadd.f32 %v1584, 1.0
    %v1589 = vmul.f32 %v1585, 0.5
    %v1590 = vmul.f32 %v1586, 0.5
    %v1591 = vmul.f32 %v1587, 0.5
    %v1592 = vmul.f32 %v1588, 0.5
    %v1593 = vtanh.pop %v1573
    %v1594 = vtanh.pop %v1574
    %v1595 = vmul.f32 %v1575, 0.5
    %v1596 = vmul.f32 %v1576, 0.5
    %v1597 = vtanh.pop %v1595
    %v1598 = vtanh.pop %v1596
    %v1599 = vadd.f32 %v1597, 1.0
    %v1600 = vadd.f32 %v1598, 1.0
    %v1601 = vmul.f32 %v1599, 0.5
    %v1602 = vmul.f32 %v1600, 0.5
    %v1603 = vmul.f32 %v1591, %v1479
    %v1604 = vmul.f32 %v1592, %v1480
    %v1605 = vmul.f32 %v1589, %v1593
    %v1606 = vmul.f32 %v1590, %v1594
    %v1607 = vadd.f32 %v1603, %v1605
    %v1608 = vadd.f32 %v1604, %v1606
    %v1609 = vtanh.pop %v1607
    %v1610 = vtanh.pop %v1608
    %v1611 = vmul.f32 %v1601, %v1609
    %v1612 = vmul.f32 %v1602, %v1610
    %1614 = vset.pattern.permute.xlu0 0
    %1615 = vperm.xlu0 %1614, %v41
    %v1616 = vpop.permute.xlu0 %1615
    %1619 = vset.pattern.permute.xlu0 0
    %1620 = vperm.xlu0 %1619, %v42
    %v1621 = vpop.permute.xlu0 %1620
    %v1623 = vmul.f32 %v1611, %v1616
    %v1624 = vmul.f32 %v1612, %v1621
    %v1625 = vsel %vm92, %v1623, 0.0
    %v1626 = vsel %vm92, %v1624, 0.0
    %v1627 = vadd.f32 %v1625, %v1626
    %v1628 = vrot.slane %v1627, 4
    %v1629 = vadd.f32 %v1627, %v1628
    %v1630 = vrot.slane %v1629, 2
    %v1631 = vadd.f32 %v1629, %v1630
    %v1632 = vrot.slane %v1631, 1
    %v1633 = vadd.f32 %v1631, %v1632
    %s1634 = sld [smem:[#allocation2]]
    %v1635 = vstv %s1634
    %v1636 = vadd.f32 %v1633, %v1635
    %vm1637 = vcmask 57344
    %1638 = vst.msk [vmem:[#allocation3] sm:$0x1] %vm1637, %v1636
    // Predicated region
    $region26: #{tpu_custom_call.1} parent=1 // pred_check
      _
    $region27: #{tpu_custom_call.1} parent=1 // pred_check_branch
      %1640 = sbr.rel (0) target = $region29
    $region28: #{tpu_custom_call.1} parent=1 // pred_region
      %1642 = vsyncadd [#allocation4], 0
      %s1644 = sshll.u32 [#allocation3], 4
      %s1645 = int_to_ptr.vmem [resolvable:$true] %s1644
      %s1646 = sshll.u32 %s6, 4
      %s1647 = int_to_ptr.hbm [resolvable:$true] %s1646
      %1649 = dma.vmem_to_hbm [thread:$0]  %s1645, 16, %s1647, [#allocation4]
    $region29: #{tpu_custom_call.1} parent=1 // pred_fallthru
      _
    // Predicated region
    $region30: #{tpu_custom_call.1} parent=1 // pred_check
      _
    $region31: #{tpu_custom_call.1} parent=1 // pred_check_branch
      %1651 = sbr.rel (0) target = $region33
    $region32: #{tpu_custom_call.1} parent=1 // pred_region
      %1653 = dma.done [#allocation4], 16
    $region33: #{tpu_custom_call.1} parent=1 // pred_fallthru
      _
    %1654 = vsyncpa [#allocation4], 1

</llo_original>
